<compile_context>
chip_gen: v5e
topology: v5e:2x2
jax: 0.10.0
libtpu: 0.0.40
codegen_flags: <defaults>
</compile_context>

<pallas_src>
import math
import jax
import jax.numpy as jnp
from jax.experimental import pallas as pl
from jax.experimental.pallas import tpu as pltpu

# ----- small, structure-identical config (real: 768 / 12 / 12 / 3072) -----
VOCAB_SIZE   = 100
HIDDEN       = 128
NUM_LAYERS   = 2
NUM_HEADS    = 4
HEAD_DIM     = HIDDEN // NUM_HEADS
INTERMEDIATE = 256
MAX_POS      = 512
LN_EPS       = 1e-12          # BERT LayerNorm eps
BATCH, SEQ   = 2, 8


def _layernorm(x, gamma, beta):
    # torch.nn.LayerNorm semantics: biased variance over last dim, f32 math
    mu = jnp.mean(x, axis=-1, keepdims=True)
    var = jnp.mean(jnp.square(x - mu), axis=-1, keepdims=True)
    return (x - mu) * jax.lax.rsqrt(var + LN_EPS) * gamma + beta


# ---------------- stacked-layer Pallas kernel ----------------
# grid = (batch_tile, layer); batch tile size = 1 (squeezed), layer carried via x_ref.

def behrt_stack_kernel(emb_ref, mask_ref, eg_ref, eb_ref,
                       wq_ref, bq_ref, wk_ref, bk_ref, wv_ref, bv_ref,
                       wo_ref, bo_ref, ln1g_ref, ln1b_ref,
                       w1_ref, b1_ref, w2_ref, b2_ref, ln2g_ref, ln2b_ref,
                       o_ref, x_ref):
    layer = pl.program_id(1)

    # Layer-0 prologue: fused embedding LayerNorm into the residual-stream scratch.
    @pl.when(layer == 0)
    def _():
        x_ref[...] = _layernorm(emb_ref[...], eg_ref[...], eb_ref[...])

    x = x_ref[...]                               # (S, H) f32 residual stream
    x_bf = x.astype(jnp.bfloat16)
    mask = mask_ref[...]                         # (1, S) additive mask (0 / -1e4)
    S = x.shape[0]

    # --- head-batched QKV projections (one hoisted broadcast, batched matmuls, f32 acc) ---
    # Wq / bq already carry the 1/sqrt(head_dim) attention scale (folded at prep time).
    x_nh = jnp.broadcast_to(x_bf[None], (NUM_HEADS, S, HIDDEN))        # (NH, S, H)
    q = jnp.einsum('nsh,nhd->nsd', x_nh, wq_ref[...],
                   preferred_element_type=jnp.float32) + bq_ref[...]   # (NH, S, HD)
    k = jnp.einsum('nsh,nhd->nsd', x_nh, wk_ref[...],
                   preferred_element_type=jnp.float32) + bk_ref[...]
    v = jnp.einsum('nsh,nhd->nsd', x_nh, wv_ref[...],
                   preferred_element_type=jnp.float32) + bv_ref[...]

    # --- scores / softmax (f32 math; divide on the EUP) ---
    s = jnp.einsum('nqd,nkd->nqk', q.astype(jnp.bfloat16), k.astype(jnp.bfloat16),
                   preferred_element_type=jnp.float32) + mask          # (NH, S, S)
    s = s - jnp.max(s, axis=-1, keepdims=True)
    p = jnp.exp(s)
    p = p * pl.reciprocal(jnp.sum(p, axis=-1, keepdims=True), approx=True)

    # --- context + output projection (summed over heads -> lane-dense (S, H)) ---
    ctx = jnp.einsum('nqk,nkd->nqd', p.astype(jnp.bfloat16), v.astype(jnp.bfloat16),
                     preferred_element_type=jnp.float32)               # (NH, S, HD)
    attn = jnp.sum(
        jnp.einsum('nqd,ndh->nqh', ctx.astype(jnp.bfloat16), wo_ref[...],
                   preferred_element_type=jnp.float32),
        axis=0) + bo_ref[...]                                          # (S, H)

    h1 = _layernorm(attn + x, ln1g_ref[...], ln1b_ref[...])            # Add & LN

    # --- FFN with exact (erf) GELU; bf16 MXU inputs, f32 accumulation ---
    f = jnp.dot(h1.astype(jnp.bfloat16), w1_ref[...],
                preferred_element_type=jnp.float32) + b1_ref[...]
    f = 0.5 * f * (1.0 + jax.lax.erf(f * (1.0 / math.sqrt(2.0))))
    f = jnp.dot(f.astype(jnp.bfloat16), w2_ref[...],
                preferred_element_type=jnp.float32) + b2_ref[...]

    out = _layernorm(f + h1, ln2g_ref[...], ln2b_ref[...])             # Add & LN

    x_ref[...] = out                 # carry residual stream to the next layer

    # CLS row; single lane-dense (1, H) store, written back to HBM once per batch tile
    @pl.when(layer == pl.num_programs(1) - 1)
    def _():
        o_ref[...] = out[0:1, :]


# ---------------- wrapper ----------------

@jax.jit
def behrt_nodemo_forward(params, input_ids, attention_mask):
    B, S = input_ids.shape
    H, NH, HD, I, L = HIDDEN, NUM_HEADS, HEAD_DIM, INTERMEDIATE, NUM_LAYERS

    # Embedding gathers are glue in plain JAX; LN + encoder run in the Pallas kernel.
    word = params['word_emb'][input_ids]                      # (B, S, H)
    pos = params['pos_emb'][:S][None, :, :]                   # (1, S, H)
    tok = params['tok_type_emb'][0][None, None, :]            # (1, 1, H)
    emb_sum = (word + pos + tok).astype(jnp.float32)

    # classic BERT extended attention mask: (1 - mask) * -10000
    mask_add = (1.0 - attention_mask.astype(jnp.float32))[:, None, :] * -10000.0

    act_spec  = pl.BlockSpec((None, S, H), lambda b, l: (b, 0, 0))
    mask_spec = pl.BlockSpec((None, 1, S), lambda b, l: (b, 0, 0))
    vecH_spec = pl.BlockSpec((1, H), lambda b, l: (0, 0))

    def stk3(d1, d2):
        return pl.BlockSpec((None, d1, d2), lambda b, l: (l, 0, 0))

    def stk4(d1, d2, d3):
        return pl.BlockSpec((None, d1, d2, d3), lambda b, l: (l, 0, 0, 0))

    grid_spec = pltpu.PrefetchScalarGridSpec(
        num_scalar_prefetch=0,
        grid=(B, L),                      # batch tiles (parallel) x layers (carried)
        in_specs=[
            act_spec, mask_spec, vecH_spec, vecH_spec,
            stk4(NH, H, HD), stk4(NH, 1, HD),     # wq, bq (scale pre-folded)
            stk4(NH, H, HD), stk4(NH, 1, HD),     # wk, bk
            stk4(NH, H, HD), stk4(NH, 1, HD),     # wv, bv
            stk4(NH, HD, H), stk3(1, H),          # wo, bo
            stk3(1, H), stk3(1, H),               # ln1 gamma, beta
            stk3(H, I), stk3(1, I),               # w1, b1
            stk3(I, H), stk3(1, H),               # w2, b2
            stk3(1, H), stk3(1, H),               # ln2 gamma, beta
        ],
        out_specs=pl.BlockSpec((None, 1, H), lambda b, l: (b, 0, 0)),
        scratch_shapes=[pltpu.VMEM((S, H), jnp.float32)],   # residual stream carry
    )

    cls = pl.pallas_call(
        behrt_stack_kernel,
        out_shape=jax.ShapeDtypeStruct((B, 1, H), jnp.float32),
        grid_spec=grid_spec,
        compiler_params=pltpu.CompilerParams(
            dimension_semantics=("parallel", "arbitrary")),
    )(emb_sum, mask_add,
      params['emb_ln_g'], params['emb_ln_b'],
      params['wq'], params['bq'], params['wk'], params['bk'],
      params['wv'], params['bv'], params['wo'], params['bo'],
      params['ln1_g'], params['ln1_b'],
      params['w1'], params['b1'], params['w2'], params['b2'],
      params['ln2_g'], params['ln2_b'])

    # outputs.last_hidden_state[:, 0, :]  (CLS token)
    return cls[:, 0, :]


def init_params(key):
    def normal(k, shape, scale=0.02):
        return scale * jax.random.normal(k, shape, dtype=jnp.float32)

    L, H, NH, HD, I = NUM_LAYERS, HIDDEN, NUM_HEADS, HEAD_DIM, INTERMEDIATE
    keys = jax.random.split(key, 9)
    params = {
        'word_emb': normal(keys[0], (VOCAB_SIZE, H)),
        'pos_emb': normal(keys[1], (MAX_POS, H)),
        'tok_type_emb': normal(keys[2], (1, H)),          # type_vocab_size = 1
        'emb_ln_g': jnp.ones((1, H), jnp.float32),
        'emb_ln_b': jnp.zeros((1, H), jnp.float32),
    }

    # Dense (in, out) weights (== transpose of PyTorch nn.Linear.weight), stacked over layers.
    wq = normal(keys[3], (L, H, H))
    wk = normal(keys[4], (L, H, H))
    wv = normal(keys[5], (L, H, H))
    wo = normal(keys[6], (L, H, H))
    w1 = normal(keys[7], (L, H, I))
    w2 = normal(keys[8], (L, I, H))
    bq = jnp.zeros((L, H), jnp.float32)

    # Fold the 1/sqrt(head_dim) attention scale into Wq / bq (done once, in f32,
    # before the bf16 cast) so the kernel never multiplies q by the scale.
    scale = 1.0 / math.sqrt(HD)
    wq = wq * scale
    bq = bq * scale

    def split_out_heads(w):   # (L, H, H) -> (L, NH, H, HD): split the OUTPUT dim per head
        return w.reshape(L, H, NH, HD).transpose(0, 2, 1, 3)

    params.update({
        # bf16 weights for the MXU (f32 accumulation in-kernel)
        'wq': split_out_heads(wq).astype(jnp.bfloat16),
        'wk': split_out_heads(wk).astype(jnp.bfloat16),
        'wv': split_out_heads(wv).astype(jnp.bfloat16),
        'wo': wo.reshape(L, NH, HD, H).astype(jnp.bfloat16),   # split INPUT dim per head
        'w1': w1.astype(jnp.bfloat16),
        'w2': w2.astype(jnp.bfloat16),
        # biases / LN params kept in f32
        'bq': bq.reshape(L, NH, 1, HD),
        'bk': jnp.zeros((L, NH, 1, HD), jnp.float32),
        'bv': jnp.zeros((L, NH, 1, HD), jnp.float32),
        'bo': jnp.zeros((L, 1, H), jnp.float32),
        'b1': jnp.zeros((L, 1, I), jnp.float32),
        'b2': jnp.zeros((L, 1, H), jnp.float32),
        'ln1_g': jnp.ones((L, 1, H), jnp.float32),
        'ln1_b': jnp.zeros((L, 1, H), jnp.float32),
        'ln2_g': jnp.ones((L, 1, H), jnp.float32),
        'ln2_b': jnp.zeros((L, 1, H), jnp.float32),
    })
    return params


if __name__ == "__main__":
    key = jax.random.PRNGKey(0)
    pkey, ikey = jax.random.split(key)
    params = init_params(pkey)

    input_ids = jax.random.randint(ikey, (BATCH, SEQ), 0, VOCAB_SIZE, dtype=jnp.int32)
    attention_mask = jnp.ones((BATCH, SEQ), dtype=jnp.int32)
    attention_mask = attention_mask.at[1, SEQ - 2:].set(0)   # ragged mask for batch 1

    out = behrt_nodemo_forward(params, input_ids, attention_mask)
    jax.block_until_ready(out)
    assert out.shape == (BATCH, HIDDEN) and out.dtype == jnp.float32
    assert bool(jnp.all(jnp.isfinite(out)))
    print("KERNEL_OK")
</pallas_src>

<mosaic_0001>
module attributes {stable_mosaic.version = 11 : i64} {
  func.func @behrt_stack_kernel(%arg0: i32, %arg1: i32, %arg2: memref<1x8x128xf32, #tpu.memory_space<vmem>>, %arg3: memref<1x1x8xf32, #tpu.memory_space<vmem>>, %arg4: memref<1x128xf32, #tpu.memory_space<vmem>>, %arg5: memref<1x128xf32, #tpu.memory_space<vmem>>, %arg6: memref<1x4x128x32xbf16, #tpu.memory_space<vmem>>, %arg7: memref<1x4x1x32xf32, #tpu.memory_space<vmem>>, %arg8: memref<1x4x128x32xbf16, #tpu.memory_space<vmem>>, %arg9: memref<1x4x1x32xf32, #tpu.memory_space<vmem>>, %arg10: memref<1x4x128x32xbf16, #tpu.memory_space<vmem>>, %arg11: memref<1x4x1x32xf32, #tpu.memory_space<vmem>>, %arg12: memref<1x4x32x128xbf16, #tpu.memory_space<vmem>>, %arg13: memref<1x1x128xf32, #tpu.memory_space<vmem>>, %arg14: memref<1x1x128xf32, #tpu.memory_space<vmem>>, %arg15: memref<1x1x128xf32, #tpu.memory_space<vmem>>, %arg16: memref<1x128x256xbf16, #tpu.memory_space<vmem>>, %arg17: memref<1x1x256xf32, #tpu.memory_space<vmem>>, %arg18: memref<1x256x128xbf16, #tpu.memory_space<vmem>>, %arg19: memref<1x1x128xf32, #tpu.memory_space<vmem>>, %arg20: memref<1x1x128xf32, #tpu.memory_space<vmem>>, %arg21: memref<1x1x128xf32, #tpu.memory_space<vmem>>, %arg22: memref<1x1x128xf32, #tpu.memory_space<vmem>>, %arg23: memref<8x128xf32, #tpu.memory_space<vmem>>) attributes {dimension_semantics = [#tpu.dimension_semantics<parallel>, #tpu.dimension_semantics<arbitrary>], iteration_bounds = array<i64: 2, 2>, scalar_prefetch = 0 : i64, scratch_operands = 1 : i64, tpu.core_type = #tpu.core_type<tc>, window_params = [{transform_indices = @transform_0, window_bounds = array<i64: 1, 8, 128>}, {transform_indices = @transform_1, window_bounds = array<i64: 1, 1, 8>}, {pipeline_mode = #tpu.pipeline_mode<synchronous>, transform_indices = @transform_2, window_bounds = array<i64: 1, 128>}, {pipeline_mode = #tpu.pipeline_mode<synchronous>, transform_indices = @transform_3, window_bounds = array<i64: 1, 128>}, {transform_indices = @transform_4, window_bounds = array<i64: 1, 4, 128, 32>}, {transform_indices = @transform_5, window_bounds = array<i64: 1, 4, 1, 32>}, {transform_indices = @transform_6, window_bounds = array<i64: 1, 4, 128, 32>}, {transform_indices = @transform_7, window_bounds = array<i64: 1, 4, 1, 32>}, {transform_indices = @transform_8, window_bounds = array<i64: 1, 4, 128, 32>}, {transform_indices = @transform_9, window_bounds = array<i64: 1, 4, 1, 32>}, {transform_indices = @transform_10, window_bounds = array<i64: 1, 4, 32, 128>}, {transform_indices = @transform_11, window_bounds = array<i64: 1, 1, 128>}, {transform_indices = @transform_12, window_bounds = array<i64: 1, 1, 128>}, {transform_indices = @transform_13, window_bounds = array<i64: 1, 1, 128>}, {transform_indices = @transform_14, window_bounds = array<i64: 1, 128, 256>}, {transform_indices = @transform_15, window_bounds = array<i64: 1, 1, 256>}, {transform_indices = @transform_16, window_bounds = array<i64: 1, 256, 128>}, {transform_indices = @transform_17, window_bounds = array<i64: 1, 1, 128>}, {transform_indices = @transform_18, window_bounds = array<i64: 1, 1, 128>}, {transform_indices = @transform_19, window_bounds = array<i64: 1, 1, 128>}, {transform_indices = @transform_20, window_bounds = array<i64: 1, 1, 128>}]} {
    %c0_i32 = arith.constant 0 : i32
    %0 = arith.cmpi eq, %arg1, %c0_i32 : i32
    %1 = arith.extui %0 : i1 to i32
    %c0_i32_0 = arith.constant 0 : i32
    %2 = arith.cmpi ne, %1, %c0_i32_0 : i32
    scf.if %2 {
      %c0_86 = arith.constant 0 : index
      %c0_87 = arith.constant 0 : index
      %c0_88 = arith.constant 0 : index
      %141 = vector.load %arg2[%c0_86, %c0_87, %c0_88] : memref<1x8x128xf32, #tpu.memory_space<vmem>>, vector<1x8x128xf32>
      %142 = vector.shape_cast %141 : vector<1x8x128xf32> to vector<8x128xf32>
      %c0_89 = arith.constant 0 : index
      %c0_90 = arith.constant 0 : index
      %143 = vector.load %arg4[%c0_89, %c0_90] : memref<1x128xf32, #tpu.memory_space<vmem>>, vector<1x128xf32>
      %c0_91 = arith.constant 0 : index
      %c0_92 = arith.constant 0 : index
      %144 = vector.load %arg5[%c0_91, %c0_92] : memref<1x128xf32, #tpu.memory_space<vmem>>, vector<1x128xf32>
      %cst_93 = arith.constant dense<0.000000e+00> : vector<8xf32>
      %145 = vector.multi_reduction <add>, %142, %cst_93 [1] : vector<8x128xf32> to vector<8xf32>
      %146 = vector.shape_cast %145 : vector<8xf32> to vector<8x1xf32>
      %cst_94 = arith.constant 1.280000e+02 : f32
      %147 = vector.broadcast %cst_94 : f32 to vector<8x1xf32>
      %148 = arith.divf %146, %147 : vector<8x1xf32>
      %149 = vector.broadcast %148 : vector<8x1xf32> to vector<8x128xf32>
      %150 = arith.subf %142, %149 : vector<8x128xf32>
      %151 = arith.mulf %150, %150 : vector<8x128xf32>
      %cst_95 = arith.constant dense<0.000000e+00> : vector<8xf32>
      %152 = vector.multi_reduction <add>, %151, %cst_95 [1] : vector<8x128xf32> to vector<8xf32>
      %153 = vector.shape_cast %152 : vector<8xf32> to vector<8x1xf32>
      %cst_96 = arith.constant 1.280000e+02 : f32
      %154 = vector.broadcast %cst_96 : f32 to vector<8x1xf32>
      %155 = arith.divf %153, %154 : vector<8x1xf32>
      %156 = vector.broadcast %148 : vector<8x1xf32> to vector<8x128xf32>
      %157 = arith.subf %142, %156 : vector<8x128xf32>
      %cst_97 = arith.constant 9.99999996E-13 : f32
      %158 = vector.broadcast %cst_97 : f32 to vector<8x1xf32>
      %159 = arith.addf %155, %158 : vector<8x1xf32>
      %160 = math.rsqrt %159 : vector<8x1xf32>
      %161 = vector.broadcast %160 : vector<8x1xf32> to vector<8x128xf32>
      %162 = arith.mulf %157, %161 : vector<8x128xf32>
      %163 = vector.broadcast %143 : vector<1x128xf32> to vector<8x128xf32>
      %164 = arith.mulf %162, %163 : vector<8x128xf32>
      %165 = vector.broadcast %144 : vector<1x128xf32> to vector<8x128xf32>
      %166 = arith.addf %164, %165 : vector<8x128xf32>
      %c0_98 = arith.constant 0 : index
      %c0_99 = arith.constant 0 : index
      %167 = vector.load %arg23[%c0_98, %c0_99] : memref<8x128xf32, #tpu.memory_space<vmem>>, vector<8x128xf32>
      tpu.vector_store %arg23[%c0_98, %c0_99], %166 {strides = array<i32>} : memref<8x128xf32, #tpu.memory_space<vmem>>, vector<8x128xf32>,
    } else {
    }
    %c0 = arith.constant 0 : index
    %c0_1 = arith.constant 0 : index
    %3 = vector.load %arg23[%c0, %c0_1] : memref<8x128xf32, #tpu.memory_space<vmem>>, vector<8x128xf32>
    %4 = arith.truncf %3 : vector<8x128xf32> to vector<8x128xbf16>
    %c0_2 = arith.constant 0 : index
    %c0_3 = arith.constant 0 : index
    %c0_4 = arith.constant 0 : index
    %5 = vector.load %arg3[%c0_2, %c0_3, %c0_4] : memref<1x1x8xf32, #tpu.memory_space<vmem>>, vector<1x1x8xf32>
    %6 = vector.shape_cast %5 : vector<1x1x8xf32> to vector<1x8xf32>
    %7 = vector.shape_cast %4 : vector<8x128xbf16> to vector<1x8x128xbf16>
    %8 = vector.shape_cast %7 : vector<1x8x128xbf16> to vector<1x8x128xbf16>
    %9 = vector.broadcast %8 : vector<1x8x128xbf16> to vector<4x8x128xbf16>
    %c0_5 = arith.constant 0 : index
    %c0_6 = arith.constant 0 : index
    %c0_7 = arith.constant 0 : index
    %c0_8 = arith.constant 0 : index
    %10 = vector.load %arg6[%c0_5, %c0_6, %c0_7, %c0_8] : memref<1x4x128x32xbf16, #tpu.memory_space<vmem>>, vector<1x4x128x32xbf16>
    %11 = vector.shape_cast %10 : vector<1x4x128x32xbf16> to vector<4x128x32xbf16>
    "tpu.trace_start"() <{level = 10 : i32, message = "nsh,nhd->nsd"}> : () -> ()
    %cst = arith.constant dense<0.000000e+00> : vector<4x8x32xf32>
    %12 = tpu.matmul %9, %11, %cst {dimension_numbers = #tpu.dot_dimension_numbers<[2], [1], [1], [2], [0, 0, 0, 1, 1, 2], [0], [0]>} : vector<4x8x128xbf16>, vector<4x128x32xbf16>, vector<4x8x32xf32> -> vector<4x8x32xf32>
    "tpu.trace_stop"() : () -> ()
    %c0_9 = arith.constant 0 : index
    %c0_10 = arith.constant 0 : index
    %c0_11 = arith.constant 0 : index
    %c0_12 = arith.constant 0 : index
    %13 = vector.load %arg7[%c0_9, %c0_10, %c0_11, %c0_12] : memref<1x4x1x32xf32, #tpu.memory_space<vmem>>, vector<1x4x1x32xf32>
    %14 = vector.shape_cast %13 : vector<1x4x1x32xf32> to vector<4x1x32xf32>
    %15 = vector.broadcast %14 : vector<4x1x32xf32> to vector<4x8x32xf32>
    %16 = arith.addf %12, %15 : vector<4x8x32xf32>
    %c0_13 = arith.constant 0 : index
    %c0_14 = arith.constant 0 : index
    %c0_15 = arith.constant 0 : index
    %c0_16 = arith.constant 0 : index
    %17 = vector.load %arg8[%c0_13, %c0_14, %c0_15, %c0_16] : memref<1x4x128x32xbf16, #tpu.memory_space<vmem>>, vector<1x4x128x32xbf16>
    %18 = vector.shape_cast %17 : vector<1x4x128x32xbf16> to vector<4x128x32xbf16>
    "tpu.trace_start"() <{level = 10 : i32, message = "nsh,nhd->nsd"}> : () -> ()
    %cst_17 = arith.constant dense<0.000000e+00> : vector<4x8x32xf32>
    %19 = tpu.matmul %9, %18, %cst_17 {dimension_numbers = #tpu.dot_dimension_numbers<[2], [1], [1], [2], [0, 0, 0, 1, 1, 2], [0], [0]>} : vector<4x8x128xbf16>, vector<4x128x32xbf16>, vector<4x8x32xf32> -> vector<4x8x32xf32>
    "tpu.trace_stop"() : () -> ()
    %c0_18 = arith.constant 0 : index
    %c0_19 = arith.constant 0 : index
    %c0_20 = arith.constant 0 : index
    %c0_21 = arith.constant 0 : index
    %20 = vector.load %arg9[%c0_18, %c0_19, %c0_20, %c0_21] : memref<1x4x1x32xf32, #tpu.memory_space<vmem>>, vector<1x4x1x32xf32>
    %21 = vector.shape_cast %20 : vector<1x4x1x32xf32> to vector<4x1x32xf32>
    %22 = vector.broadcast %21 : vector<4x1x32xf32> to vector<4x8x32xf32>
    %23 = arith.addf %19, %22 : vector<4x8x32xf32>
    %c0_22 = arith.constant 0 : index
    %c0_23 = arith.constant 0 : index
    %c0_24 = arith.constant 0 : index
    %c0_25 = arith.constant 0 : index
    %24 = vector.load %arg10[%c0_22, %c0_23, %c0_24, %c0_25] : memref<1x4x128x32xbf16, #tpu.memory_space<vmem>>, vector<1x4x128x32xbf16>
    %25 = vector.shape_cast %24 : vector<1x4x128x32xbf16> to vector<4x128x32xbf16>
    "tpu.trace_start"() <{level = 10 : i32, message = "nsh,nhd->nsd"}> : () -> ()
    %cst_26 = arith.constant dense<0.000000e+00> : vector<4x8x32xf32>
    %26 = tpu.matmul %9, %25, %cst_26 {dimension_numbers = #tpu.dot_dimension_numbers<[2], [1], [1], [2], [0, 0, 0, 1, 1, 2], [0], [0]>} : vector<4x8x128xbf16>, vector<4x128x32xbf16>, vector<4x8x32xf32> -> vector<4x8x32xf32>
    "tpu.trace_stop"() : () -> ()
    %c0_27 = arith.constant 0 : index
    %c0_28 = arith.constant 0 : index
    %c0_29 = arith.constant 0 : index
    %c0_30 = arith.constant 0 : index
    %27 = vector.load %arg11[%c0_27, %c0_28, %c0_29, %c0_30] : memref<1x4x1x32xf32, #tpu.memory_space<vmem>>, vector<1x4x1x32xf32>
    %28 = vector.shape_cast %27 : vector<1x4x1x32xf32> to vector<4x1x32xf32>
    %29 = vector.broadcast %28 : vector<4x1x32xf32> to vector<4x8x32xf32>
    %30 = arith.addf %26, %29 : vector<4x8x32xf32>
    %31 = arith.truncf %16 : vector<4x8x32xf32> to vector<4x8x32xbf16>
    %32 = arith.truncf %23 : vector<4x8x32xf32> to vector<4x8x32xbf16>
    "tpu.trace_start"() <{level = 10 : i32, message = "nqd,nkd->nqk"}> : () -> ()
    %cst_31 = arith.constant dense<0.000000e+00> : vector<4x8x8xf32>
    %33 = tpu.matmul %31, %32, %cst_31 {dimension_numbers = #tpu.dot_dimension_numbers<[2], [2], [1], [1], [0, 0, 0, 1, 1, 1], [0], [0]>} : vector<4x8x32xbf16>, vector<4x8x32xbf16>, vector<4x8x8xf32> -> vector<4x8x8xf32>
    "tpu.trace_stop"() : () -> ()
    %34 = vector.shape_cast %6 : vector<1x8xf32> to vector<1x1x8xf32>
    %35 = vector.broadcast %34 : vector<1x1x8xf32> to vector<4x8x8xf32>
    %36 = arith.addf %33, %35 : vector<4x8x8xf32>
    %cst_32 = arith.constant dense<0xFF800000> : vector<4x8xf32>
    %37 = vector.multi_reduction <maximumf>, %36, %cst_32 [2] : vector<4x8x8xf32> to vector<4x8xf32>
    %38 = vector.shape_cast %37 : vector<4x8xf32> to vector<4x8x1xf32>
    %39 = vector.broadcast %38 : vector<4x8x1xf32> to vector<4x8x8xf32>
    %40 = arith.subf %36, %39 : vector<4x8x8xf32>
    %41 = math.exp %40 : vector<4x8x8xf32>
    %cst_33 = arith.constant dense<0.000000e+00> : vector<4x8xf32>
    %42 = vector.multi_reduction <add>, %41, %cst_33 [2] : vector<4x8x8xf32> to vector<4x8xf32>
    %43 = vector.shape_cast %42 : vector<4x8xf32> to vector<4x8x1xf32>
    %44 = tpu.reciprocal %43 {approx = true} : vector<4x8x1xf32> -> vector<4x8x1xf32>
    %45 = vector.broadcast %44 : vector<4x8x1xf32> to vector<4x8x8xf32>
    %46 = arith.mulf %41, %45 : vector<4x8x8xf32>
    %47 = arith.truncf %46 : vector<4x8x8xf32> to vector<4x8x8xbf16>
    %48 = arith.truncf %30 : vector<4x8x32xf32> to vector<4x8x32xbf16>
    "tpu.trace_start"() <{level = 10 : i32, message = "nqk,nkd->nqd"}> : () -> ()
    %cst_34 = arith.constant dense<0.000000e+00> : vector<4x8x32xf32>
    %49 = tpu.matmul %47, %48, %cst_34 {dimension_numbers = #tpu.dot_dimension_numbers<[2], [1], [1], [2], [0, 0, 0, 1, 1, 2], [0], [0]>} : vector<4x8x8xbf16>, vector<4x8x32xbf16>, vector<4x8x32xf32> -> vector<4x8x32xf32>
    "tpu.trace_stop"() : () -> ()
    %50 = arith.truncf %49 : vector<4x8x32xf32> to vector<4x8x32xbf16>
    %c0_35 = arith.constant 0 : index
    %c0_36 = arith.constant 0 : index
    %c0_37 = arith.constant 0 : index
    %c0_38 = arith.constant 0 : index
    %51 = vector.load %arg12[%c0_35, %c0_36, %c0_37, %c0_38] : memref<1x4x32x128xbf16, #tpu.memory_space<vmem>>, vector<1x4x32x128xbf16>
    %52 = vector.shape_cast %51 : vector<1x4x32x128xbf16> to vector<4x32x128xbf16>
    "tpu.trace_start"() <{level = 10 : i32, message = "nqd,ndh->nqh"}> : () -> ()
    %cst_39 = arith.constant dense<0.000000e+00> : vector<4x8x128xf32>
    %53 = tpu.matmul %50, %52, %cst_39 {dimension_numbers = #tpu.dot_dimension_numbers<[2], [1], [1], [2], [0, 0, 0, 1, 1, 2], [0], [0]>} : vector<4x8x32xbf16>, vector<4x32x128xbf16>, vector<4x8x128xf32> -> vector<4x8x128xf32>
    "tpu.trace_stop"() : () -> ()
    %cst_40 = arith.constant dense<0.000000e+00> : vector<8x128xf32>
    %54 = vector.multi_reduction <add>, %53, %cst_40 [0] : vector<4x8x128xf32> to vector<8x128xf32>
    %c0_41 = arith.constant 0 : index
    %c0_42 = arith.constant 0 : index
    %c0_43 = arith.constant 0 : index
    %55 = vector.load %arg13[%c0_41, %c0_42, %c0_43] : memref<1x1x128xf32, #tpu.memory_space<vmem>>, vector<1x1x128xf32>
    %56 = vector.shape_cast %55 : vector<1x1x128xf32> to vector<1x128xf32>
    %57 = vector.broadcast %56 : vector<1x128xf32> to vector<8x128xf32>
    %58 = arith.addf %54, %57 : vector<8x128xf32>
    %59 = arith.addf %58, %3 : vector<8x128xf32>
    %c0_44 = arith.constant 0 : index
    %c0_45 = arith.constant 0 : index
    %c0_46 = arith.constant 0 : index
    %60 = vector.load %arg14[%c0_44, %c0_45, %c0_46] : memref<1x1x128xf32, #tpu.memory_space<vmem>>, vector<1x1x128xf32>
    %61 = vector.shape_cast %60 : vector<1x1x128xf32> to vector<1x128xf32>
    %c0_47 = arith.constant 0 : index
    %c0_48 = arith.constant 0 : index
    %c0_49 = arith.constant 0 : index
    %62 = vector.load %arg15[%c0_47, %c0_48, %c0_49] : memref<1x1x128xf32, #tpu.memory_space<vmem>>, vector<1x1x128xf32>
    %63 = vector.shape_cast %62 : vector<1x1x128xf32> to vector<1x128xf32>
    %cst_50 = arith.constant dense<0.000000e+00> : vector<8xf32>
    %64 = vector.multi_reduction <add>, %59, %cst_50 [1] : vector<8x128xf32> to vector<8xf32>
    %65 = vector.shape_cast %64 : vector<8xf32> to vector<8x1xf32>
    %cst_51 = arith.constant 1.280000e+02 : f32
    %66 = vector.broadcast %cst_51 : f32 to vector<8x1xf32>
    %67 = arith.divf %65, %66 : vector<8x1xf32>
    %68 = vector.broadcast %67 : vector<8x1xf32> to vector<8x128xf32>
    %69 = arith.subf %59, %68 : vector<8x128xf32>
    %70 = arith.mulf %69, %69 : vector<8x128xf32>
    %cst_52 = arith.constant dense<0.000000e+00> : vector<8xf32>
    %71 = vector.multi_reduction <add>, %70, %cst_52 [1] : vector<8x128xf32> to vector<8xf32>
    %72 = vector.shape_cast %71 : vector<8xf32> to vector<8x1xf32>
    %cst_53 = arith.constant 1.280000e+02 : f32
    %73 = vector.broadcast %cst_53 : f32 to vector<8x1xf32>
    %74 = arith.divf %72, %73 : vector<8x1xf32>
    %75 = vector.broadcast %67 : vector<8x1xf32> to vector<8x128xf32>
    %76 = arith.subf %59, %75 : vector<8x128xf32>
    %cst_54 = arith.constant 9.99999996E-13 : f32
    %77 = vector.broadcast %cst_54 : f32 to vector<8x1xf32>
    %78 = arith.addf %74, %77 : vector<8x1xf32>
    %79 = math.rsqrt %78 : vector<8x1xf32>
    %80 = vector.broadcast %79 : vector<8x1xf32> to vector<8x128xf32>
    %81 = arith.mulf %76, %80 : vector<8x128xf32>
    %82 = vector.broadcast %61 : vector<1x128xf32> to vector<8x128xf32>
    %83 = arith.mulf %81, %82 : vector<8x128xf32>
    %84 = vector.broadcast %63 : vector<1x128xf32> to vector<8x128xf32>
    %85 = arith.addf %83, %84 : vector<8x128xf32>
    %86 = arith.truncf %85 : vector<8x128xf32> to vector<8x128xbf16>
    %c0_55 = arith.constant 0 : index
    %c0_56 = arith.constant 0 : index
    %c0_57 = arith.constant 0 : index
    %87 = vector.load %arg16[%c0_55, %c0_56, %c0_57] : memref<1x128x256xbf16, #tpu.memory_space<vmem>>, vector<1x128x256xbf16>
    %88 = vector.shape_cast %87 : vector<1x128x256xbf16> to vector<128x256xbf16>
    %cst_58 = arith.constant dense<0.000000e+00> : vector<8x256xf32>
    %89 = tpu.matmul %86, %88, %cst_58 {dimension_numbers = #tpu.dot_dimension_numbers<[1], [0], [0], [1], [0, 0, 1, 1], [], []>} : vector<8x128xbf16>, vector<128x256xbf16>, vector<8x256xf32> -> vector<8x256xf32>
    %c0_59 = arith.constant 0 : index
    %c0_60 = arith.constant 0 : index
    %c0_61 = arith.constant 0 : index
    %90 = vector.load %arg17[%c0_59, %c0_60, %c0_61] : memref<1x1x256xf32, #tpu.memory_space<vmem>>, vector<1x1x256xf32>
    %91 = vector.shape_cast %90 : vector<1x1x256xf32> to vector<1x256xf32>
    %92 = vector.broadcast %91 : vector<1x256xf32> to vector<8x256xf32>
    %93 = arith.addf %89, %92 : vector<8x256xf32>
    %cst_62 = arith.constant 5.000000e-01 : f32
    %94 = vector.broadcast %cst_62 : f32 to vector<8x256xf32>
    %95 = arith.mulf %94, %93 : vector<8x256xf32>
    %cst_63 = arith.constant 0.707106769 : f32
    %96 = vector.broadcast %cst_63 : f32 to vector<8x256xf32>
    %97 = arith.mulf %93, %96 : vector<8x256xf32>
    %98 = math.erf %97 : vector<8x256xf32>
    %cst_64 = arith.constant 1.000000e+00 : f32
    %99 = vector.broadcast %cst_64 : f32 to vector<8x256xf32>
    %100 = arith.addf %99, %98 : vector<8x256xf32>
    %101 = arith.mulf %95, %100 : vector<8x256xf32>
    %102 = arith.truncf %101 : vector<8x256xf32> to vector<8x256xbf16>
    %c0_65 = arith.constant 0 : index
    %c0_66 = arith.constant 0 : index
    %c0_67 = arith.constant 0 : index
    %103 = vector.load %arg18[%c0_65, %c0_66, %c0_67] : memref<1x256x128xbf16, #tpu.memory_space<vmem>>, vector<1x256x128xbf16>
    %104 = vector.shape_cast %103 : vector<1x256x128xbf16> to vector<256x128xbf16>
    %cst_68 = arith.constant dense<0.000000e+00> : vector<8x128xf32>
    %105 = tpu.matmul %102, %104, %cst_68 {dimension_numbers = #tpu.dot_dimension_numbers<[1], [0], [0], [1], [0, 0, 1, 1], [], []>} : vector<8x256xbf16>, vector<256x128xbf16>, vector<8x128xf32> -> vector<8x128xf32>
    %c0_69 = arith.constant 0 : index
    %c0_70 = arith.constant 0 : index
    %c0_71 = arith.constant 0 : index
    %106 = vector.load %arg19[%c0_69, %c0_70, %c0_71] : memref<1x1x128xf32, #tpu.memory_space<vmem>>, vector<1x1x128xf32>
    %107 = vector.shape_cast %106 : vector<1x1x128xf32> to vector<1x128xf32>
    %108 = vector.broadcast %107 : vector<1x128xf32> to vector<8x128xf32>
    %109 = arith.addf %105, %108 : vector<8x128xf32>
    %110 = arith.addf %109, %85 : vector<8x128xf32>
    %c0_72 = arith.constant 0 : index
    %c0_73 = arith.constant 0 : index
    %c0_74 = arith.constant 0 : index
    %111 = vector.load %arg20[%c0_72, %c0_73, %c0_74] : memref<1x1x128xf32, #tpu.memory_space<vmem>>, vector<1x1x128xf32>
    %112 = vector.shape_cast %111 : vector<1x1x128xf32> to vector<1x128xf32>
    %c0_75 = arith.constant 0 : index
    %c0_76 = arith.constant 0 : index
    %c0_77 = arith.constant 0 : index
    %113 = vector.load %arg21[%c0_75, %c0_76, %c0_77] : memref<1x1x128xf32, #tpu.memory_space<vmem>>, vector<1x1x128xf32>
    %114 = vector.shape_cast %113 : vector<1x1x128xf32> to vector<1x128xf32>
    %cst_78 = arith.constant dense<0.000000e+00> : vector<8xf32>
    %115 = vector.multi_reduction <add>, %110, %cst_78 [1] : vector<8x128xf32> to vector<8xf32>
    %116 = vector.shape_cast %115 : vector<8xf32> to vector<8x1xf32>
    %cst_79 = arith.constant 1.280000e+02 : f32
    %117 = vector.broadcast %cst_79 : f32 to vector<8x1xf32>
    %118 = arith.divf %116, %117 : vector<8x1xf32>
    %119 = vector.broadcast %118 : vector<8x1xf32> to vector<8x128xf32>
    %120 = arith.subf %110, %119 : vector<8x128xf32>
    %121 = arith.mulf %120, %120 : vector<8x128xf32>
    %cst_80 = arith.constant dense<0.000000e+00> : vector<8xf32>
    %122 = vector.multi_reduction <add>, %121, %cst_80 [1] : vector<8x128xf32> to vector<8xf32>
    %123 = vector.shape_cast %122 : vector<8xf32> to vector<8x1xf32>
    %cst_81 = arith.constant 1.280000e+02 : f32
    %124 = vector.broadcast %cst_81 : f32 to vector<8x1xf32>
    %125 = arith.divf %123, %124 : vector<8x1xf32>
    %126 = vector.broadcast %118 : vector<8x1xf32> to vector<8x128xf32>
    %127 = arith.subf %110, %126 : vector<8x128xf32>
    %cst_82 = arith.constant 9.99999996E-13 : f32
    %128 = vector.broadcast %cst_82 : f32 to vector<8x1xf32>
    %129 = arith.addf %125, %128 : vector<8x1xf32>
    %130 = math.rsqrt %129 : vector<8x1xf32>
    %131 = vector.broadcast %130 : vector<8x1xf32> to vector<8x128xf32>
    %132 = arith.mulf %127, %131 : vector<8x128xf32>
    %133 = vector.broadcast %112 : vector<1x128xf32> to vector<8x128xf32>
    %134 = arith.mulf %132, %133 : vector<8x128xf32>
    %135 = vector.broadcast %114 : vector<1x128xf32> to vector<8x128xf32>
    %136 = arith.addf %134, %135 : vector<8x128xf32>
    %c0_83 = arith.constant 0 : index
    %c0_84 = arith.constant 0 : index
    %137 = vector.load %arg23[%c0_83, %c0_84] : memref<8x128xf32, #tpu.memory_space<vmem>>, vector<8x128xf32>
    tpu.vector_store %arg23[%c0_83, %c0_84], %136 {strides = array<i32>} : memref<8x128xf32, #tpu.memory_space<vmem>>, vector<8x128xf32>,
    %c1_i32 = arith.constant 1 : i32
    %138 = arith.cmpi eq, %arg1, %c1_i32 : i32
    %139 = arith.extui %138 : i1 to i32
    %c0_i32_85 = arith.constant 0 : i32
    %140 = arith.cmpi ne, %139, %c0_i32_85 : i32
    scf.if %140 {
      %141 = vector.extract_strided_slice %136 {offsets = [0, 0], sizes = [1, 128], strides = [1, 1]} : vector<8x128xf32> to vector<1x128xf32>
      %c0_86 = arith.constant 0 : index
      %c0_87 = arith.constant 0 : index
      %c0_88 = arith.constant 0 : index
      %142 = vector.load %arg22[%c0_86, %c0_87, %c0_88] : memref<1x1x128xf32, #tpu.memory_space<vmem>>, vector<1x1x128xf32>
      %143 = vector.shape_cast %142 : vector<1x1x128xf32> to vector<1x128xf32>
      %144 = vector.shape_cast %141 : vector<1x128xf32> to vector<1x1x128xf32>
      tpu.vector_store %arg22[%c0_86, %c0_87, %c0_88], %144 {strides = array<i32>} : memref<1x1x128xf32, #tpu.memory_space<vmem>>, vector<1x1x128xf32>,
    } else {
    }
    return
  }
  func.func @transform_0(%arg0: i32, %arg1: i32) -> (i32, i32, i32) {
    %c0_i32 = arith.constant 0 : i32
    %c0_i32_0 = arith.constant 0 : i32
    %c0_i32_1 = arith.constant 0 : i32
    return %arg0, %c0_i32, %c0_i32_0 : i32, i32, i32
  }
  func.func @transform_1(%arg0: i32, %arg1: i32) -> (i32, i32, i32) {
    %c0_i32 = arith.constant 0 : i32
    %c0_i32_0 = arith.constant 0 : i32
    %c0_i32_1 = arith.constant 0 : i32
    return %arg0, %c0_i32, %c0_i32_0 : i32, i32, i32
  }
  func.func @transform_2(%arg0: i32, %arg1: i32) -> (i32, i32) {
    %c0_i32 = arith.constant 0 : i32
    %c0_i32_0 = arith.constant 0 : i32
    %c0_i32_1 = arith.constant 0 : i32
    return %c0_i32, %c0_i32_0 : i32, i32
  }
  func.func @transform_3(%arg0: i32, %arg1: i32) -> (i32, i32) {
    %c0_i32 = arith.constant 0 : i32
    %c0_i32_0 = arith.constant 0 : i32
    %c0_i32_1 = arith.constant 0 : i32
    return %c0_i32, %c0_i32_0 : i32, i32
  }
  func.func @transform_4(%arg0: i32, %arg1: i32) -> (i32, i32, i32, i32) {
    %c0_i32 = arith.constant 0 : i32
    %c0_i32_0 = arith.constant 0 : i32
    %c0_i32_1 = arith.constant 0 : i32
    %c0_i32_2 = arith.constant 0 : i32
    return %arg1, %c0_i32, %c0_i32_0, %c0_i32_1 : i32, i32, i32, i32
  }
  func.func @transform_5(%arg0: i32, %arg1: i32) -> (i32, i32, i32, i32) {
    %c0_i32 = arith.constant 0 : i32
    %c0_i32_0 = arith.constant 0 : i32
    %c0_i32_1 = arith.constant 0 : i32
    %c0_i32_2 = arith.constant 0 : i32
    return %arg1, %c0_i32, %c0_i32_0, %c0_i32_1 : i32, i32, i32, i32
  }
  func.func @transform_6(%arg0: i32, %arg1: i32) -> (i32, i32, i32, i32) {
    %c0_i32 = arith.constant 0 : i32
    %c0_i32_0 = arith.constant 0 : i32
    %c0_i32_1 = arith.constant 0 : i32
    %c0_i32_2 = arith.constant 0 : i32
    return %arg1, %c0_i32, %c0_i32_0, %c0_i32_1 : i32, i32, i32, i32
  }
  func.func @transform_7(%arg0: i32, %arg1: i32) -> (i32, i32, i32, i32) {
    %c0_i32 = arith.constant 0 : i32
    %c0_i32_0 = arith.constant 0 : i32
    %c0_i32_1 = arith.constant 0 : i32
    %c0_i32_2 = arith.constant 0 : i32
    return %arg1, %c0_i32, %c0_i32_0, %c0_i32_1 : i32, i32, i32, i32
  }
  func.func @transform_8(%arg0: i32, %arg1: i32) -> (i32, i32, i32, i32) {
    %c0_i32 = arith.constant 0 : i32
    %c0_i32_0 = arith.constant 0 : i32
    %c0_i32_1 = arith.constant 0 : i32
    %c0_i32_2 = arith.constant 0 : i32
    return %arg1, %c0_i32, %c0_i32_0, %c0_i32_1 : i32, i32, i32, i32
  }
  func.func @transform_9(%arg0: i32, %arg1: i32) -> (i32, i32, i32, i32) {
    %c0_i32 = arith.constant 0 : i32
    %c0_i32_0 = arith.constant 0 : i32
    %c0_i32_1 = arith.constant 0 : i32
    %c0_i32_2 = arith.constant 0 : i32
    return %arg1, %c0_i32, %c0_i32_0, %c0_i32_1 : i32, i32, i32, i32
  }
  func.func @transform_10(%arg0: i32, %arg1: i32) -> (i32, i32, i32, i32) {
    %c0_i32 = arith.constant 0 : i32
    %c0_i32_0 = arith.constant 0 : i32
    %c0_i32_1 = arith.constant 0 : i32
    %c0_i32_2 = arith.constant 0 : i32
    return %arg1, %c0_i32, %c0_i32_0, %c0_i32_1 : i32, i32, i32, i32
  }
  func.func @transform_11(%arg0: i32, %arg1: i32) -> (i32, i32, i32) {
    %c0_i32 = arith.constant 0 : i32
    %c0_i32_0 = arith.constant 0 : i32
    %c0_i32_1 = arith.constant 0 : i32
    return %arg1, %c0_i32, %c0_i32_0 : i32, i32, i32
  }
  func.func @transform_12(%arg0: i32, %arg1: i32) -> (i32, i32, i32) {
    %c0_i32 = arith.constant 0 : i32
    %c0_i32_0 = arith.constant 0 : i32
    %c0_i32_1 = arith.constant 0 : i32
    return %arg1, %c0_i32, %c0_i32_0 : i32, i32, i32
  }
  func.func @transform_13(%arg0: i32, %arg1: i32) -> (i32, i32, i32) {
    %c0_i32 = arith.constant 0 : i32
    %c0_i32_0 = arith.constant 0 : i32
    %c0_i32_1 = arith.constant 0 : i32
    return %arg1, %c0_i32, %c0_i32_0 : i32, i32, i32
  }
  func.func @transform_14(%arg0: i32, %arg1: i32) -> (i32, i32, i32) {
    %c0_i32 = arith.constant 0 : i32
    %c0_i32_0 = arith.constant 0 : i32
    %c0_i32_1 = arith.constant 0 : i32
    return %arg1, %c0_i32, %c0_i32_0 : i32, i32, i32
  }
  func.func @transform_15(%arg0: i32, %arg1: i32) -> (i32, i32, i32) {
    %c0_i32 = arith.constant 0 : i32
    %c0_i32_0 = arith.constant 0 : i32
    %c0_i32_1 = arith.constant 0 : i32
    return %arg1, %c0_i32, %c0_i32_0 : i32, i32, i32
  }
  func.func @transform_16(%arg0: i32, %arg1: i32) -> (i32, i32, i32) {
    %c0_i32 = arith.constant 0 : i32
    %c0_i32_0 = arith.constant 0 : i32
    %c0_i32_1 = arith.constant 0 : i32
    return %arg1, %c0_i32, %c0_i32_0 : i32, i32, i32
  }
  func.func @transform_17(%arg0: i32, %arg1: i32) -> (i32, i32, i32) {
    %c0_i32 = arith.constant 0 : i32
    %c0_i32_0 = arith.constant 0 : i32
    %c0_i32_1 = arith.constant 0 : i32
    return %arg1, %c0_i32, %c0_i32_0 : i32, i32, i32
  }
  func.func @transform_18(%arg0: i32, %arg1: i32) -> (i32, i32, i32) {
    %c0_i32 = arith.constant 0 : i32
    %c0_i32_0 = arith.constant 0 : i32
    %c0_i32_1 = arith.constant 0 : i32
    return %arg1, %c0_i32, %c0_i32_0 : i32, i32, i32
  }
  func.func @transform_19(%arg0: i32, %arg1: i32) -> (i32, i32, i32) {
    %c0_i32 = arith.constant 0 : i32
    %c0_i32_0 = arith.constant 0 : i32
    %c0_i32_1 = arith.constant 0 : i32
    return %arg1, %c0_i32, %c0_i32_0 : i32, i32, i32
  }
  func.func @transform_20(%arg0: i32, %arg1: i32) -> (i32, i32, i32) {
    %c0_i32 = arith.constant 0 : i32
    %c0_i32_0 = arith.constant 0 : i32
    %c0_i32_1 = arith.constant 0 : i32
    return %arg0, %c0_i32, %c0_i32_0 : i32, i32, i32
  }
}

</mosaic_0001>

<llo_original>
// kernel: behrt_nodemo_forward.1
$region0: #{behrt_nodemo_forward.1}
  #allocation0 [shape = 'u32[]', space=smem, size = 0x4, offset = 0x4, fixed_abs, tag = 'smem constant byte address 0x4 - core index']
  #allocation1 [shape = 'u32[72,128]{1,0:T(1,128)}', space=vmem, size = 0x9000, scoped, tag = 'internal scratch']
  #allocation2 [shape = 'f32[8,128]{1,0:T(8,128)}', space=vmem, size = 0x1000, scoped, tag = 'scratch operand']
  %s0 = inlined_call_operand.vmem [shape: f32[2,8,128], index: 0, kind: input, shape index: {}]
  %s1 = inlined_call_operand.vmem [shape: f32[2,1,8], index: 1, kind: input, shape index: {}]
  %s2 = inlined_call_operand.vmem [shape: f32[1,128], index: 2, kind: input, shape index: {}]
  %s3 = inlined_call_operand.vmem [shape: f32[1,128], index: 3, kind: input, shape index: {}]
  %s4 = inlined_call_operand.vmem [shape: bf16[2,4,128,32], index: 4, kind: input, shape index: {}]
  %s5 = inlined_call_operand.vmem [shape: f32[2,4,1,32], index: 5, kind: input, shape index: {}]
  %s6 = inlined_call_operand.vmem [shape: bf16[2,4,128,32], index: 6, kind: input, shape index: {}]
  %s7 = inlined_call_operand.vmem [shape: f32[2,4,1,32], index: 7, kind: input, shape index: {}]
  %s8 = inlined_call_operand.vmem [shape: bf16[2,4,128,32], index: 8, kind: input, shape index: {}]
  %s9 = inlined_call_operand.vmem [shape: f32[2,4,1,32], index: 9, kind: input, shape index: {}]
  %s10 = inlined_call_operand.vmem [shape: bf16[2,4,32,128], index: 10, kind: input, shape index: {}]
  %s11 = inlined_call_operand.vmem [shape: f32[2,1,128], index: 11, kind: input, shape index: {}]
  %s12 = inlined_call_operand.vmem [shape: f32[2,1,128], index: 12, kind: input, shape index: {}]
  %s13 = inlined_call_operand.vmem [shape: f32[2,1,128], index: 13, kind: input, shape index: {}]
  %s14 = inlined_call_operand.vmem [shape: bf16[2,128,256], index: 14, kind: input, shape index: {}]
  %s15 = inlined_call_operand.vmem [shape: f32[2,1,256], index: 15, kind: input, shape index: {}]
  %s16 = inlined_call_operand.vmem [shape: bf16[2,256,128], index: 16, kind: input, shape index: {}]
  %s17 = inlined_call_operand.vmem [shape: f32[2,1,128], index: 17, kind: input, shape index: {}]
  %s18 = inlined_call_operand.vmem [shape: f32[2,1,128], index: 18, kind: input, shape index: {}]
  %s19 = inlined_call_operand.vmem [shape: f32[2,1,128], index: 19, kind: input, shape index: {}]
  %s20 = inlined_call_operand.hbm [shape: f32[2,1,128], index: 20, kind: output, shape index: {}]
  %s21 = sld [smem:[#allocation0]]
  $region121: #{behrt_nodemo_forward.1} parent=0
    _
  %s23 = ssub.s32 1, %s21
  %s24 = scalar_select 0, %s23, %s21
  $region1: #{behrt_nodemo_forward.1} parent=0
    #allocation3 [shape = 'u8[1024]{0}', space=vmem, size = 0x400, scoped, tag = 'output window, operand 0']
    #allocation4 [shape = 's32[2]{0}', space=sflag, size = 0x8, scoped, tag = 'scoped memory for behrt_nodemo_forward.1']
    %25 = vsyncpa [#allocation4], 0
    %s26 = scalar_lea.sflag [#allocation4], 1
    %27 = vsyncpa %s26, 0
    loop: start=0, step=1, limit=6
    $region2: #{behrt_nodemo_forward.1} parent=1 // loop_pre_header
      _
    $region3: #{behrt_nodemo_forward.1} parent=1 // loop_header
      %s29 = sphi 0, %s33
      %p30 = scmp.ge.s32.totalorder %s29, 6
      %s36 = sphi 0, %s48
      %s37 = sphi 0, %s44
      %s38 = sphi 0, %s36
      %s39 = sphi 0, %s37
      %s40 = sphi 0, %s38
      %s41 = sphi 0, %s39
      %s51 = sphi 0, %s53
      %s54 = sphi 0, %s51
      %s55 = sphi 0, %s54
      %s71 = sphi 0, %s55
      %s77 = sphi 0, %s79
      %s80 = sphi 0, %s77
      %s81 = sphi 0, %s80
      %s97 = sphi 0, %s81
      %s101 = sphi 0, %s101
      %s103 = sphi 0, %s101
      %s104 = sphi 0, %s103
      %s118 = sphi 0, %s104
      %s122 = sphi 0, %s122
      %s124 = sphi 0, %s122
      %s125 = sphi 0, %s124
      %s139 = sphi 0, %s125
      %s145 = sphi 0, %s147
      %s148 = sphi 0, %s145
      %s149 = sphi 0, %s148
      %s165 = sphi 0, %s149
      %s171 = sphi 0, %s173
      %s174 = sphi 0, %s171
      %s175 = sphi 0, %s174
      %s191 = sphi 0, %s175
      %s197 = sphi 0, %s199
      %s200 = sphi 0, %s197
      %s201 = sphi 0, %s200
      %s217 = sphi 0, %s201
      %s223 = sphi 0, %s225
      %s226 = sphi 0, %s223
      %s227 = sphi 0, %s226
      %s243 = sphi 0, %s227
      %s249 = sphi 0, %s251
      %s252 = sphi 0, %s249
      %s253 = sphi 0, %s252
      %s269 = sphi 0, %s253
      %s275 = sphi 0, %s277
      %s278 = sphi 0, %s275
      %s279 = sphi 0, %s278
      %s295 = sphi 0, %s279
      %s301 = sphi 0, %s303
      %s304 = sphi 0, %s301
      %s305 = sphi 0, %s304
      %s321 = sphi 0, %s305
      %s327 = sphi 0, %s329
      %s330 = sphi 0, %s327
      %s331 = sphi 0, %s330
      %s347 = sphi 0, %s331
      %s353 = sphi 0, %s355
      %s356 = sphi 0, %s353
      %s357 = sphi 0, %s356
      %s373 = sphi 0, %s357
      %s379 = sphi 0, %s381
      %s382 = sphi 0, %s379
      %s383 = sphi 0, %s382
      %s399 = sphi 0, %s383
      %s405 = sphi 0, %s407
      %s408 = sphi 0, %s405
      %s409 = sphi 0, %s408
      %s425 = sphi 0, %s409
      %s431 = sphi 0, %s433
      %s434 = sphi 0, %s431
      %s435 = sphi 0, %s434
      %s451 = sphi 0, %s435
      %s457 = sphi 0, %s459
      %s460 = sphi 0, %s457
      %s461 = sphi 0, %s460
      %s477 = sphi 0, %s461
      %s483 = sphi 0, %s485
      %s486 = sphi 0, %s483
      %s487 = sphi 0, %s486
      %s503 = sphi 0, %s487
      %s509 = sphi 0, %s511
      %s512 = sphi 0, %s509
      %s513 = sphi 0, %s512
      %s529 = sphi 0, %s513
      %s535 = sphi 0, %s537
      %s538 = sphi 0, %s535
      %s539 = sphi 0, %s538
      %s555 = sphi 0, %s539
      %s561 = sphi 0, %s563
      %s564 = sphi 0, %s561
      %s565 = sphi 0, %s564
      %s581 = sphi 0, %s565
    $region4: #{behrt_nodemo_forward.1} parent=1 // loop_header_branch
      %32 = sbr.rel (%p30) target = $region8
    $region5: #{behrt_nodemo_forward.1} parent=1 // loop_body
      %s34 = ssub.s32 %s29, 1
      %s35 = ssub.s32 %s29, 2
      %s42 = sadd.s32 1, %s37
      %p43 = scmp.ge.s32.totalorder %s42, 2
      %s44 = scalar_select %p43, 0, %s42
      %s45 = sadd.s32 1, %s36
      %s46 = scalar_select %p43, %s45, %s36
      %p47 = scmp.ge.s32.totalorder %s46, 2
      %s48 = scalar_select %p47, 0, %s46
      %s49 = ssub.s32 %s36, %s48
      %p50 = scmp.eq.s32.totalorder %s49, 0
      %s52 = sadd.s32 %s51, 1
      %s53 = scalar_select %p50, %s51, %s52
      %p56 = pneg %p50
      %p57 = scmp.eq.s32.totalorder %s29, 3
      %p58 = por %p56, %p57
      %p59 = scmp.ne.s32.totalorder %s51, %s54
      %p60 = scmp.eq.s32.totalorder %s29, 0
      %p61 = por %p59, %p60
      %p62 = scmp.ne.s32.totalorder %s51, %s54
      %p63 = scmp.eq.s32.totalorder %s34, 3
      %p64 = por %p62, %p63
      %p65 = scmp.ne.s32.totalorder %s54, %s55
      %p66 = scmp.eq.s32.totalorder %s34, 0
      %p67 = por %p65, %p66
      %p68 = scmp.ne.s32.totalorder %s54, %s55
      %p69 = scmp.eq.s32.totalorder %s35, 3
      %p70 = por %p68, %p69
      %p72 = scmp.ne.s32.totalorder %s55, %s71
      %p73 = scmp.eq.s32.totalorder %s35, 0
      %p74 = por %p72, %p73
      %s75 = ssub.s32 %s36, %s48
      %p76 = scmp.eq.s32.totalorder %s75, 0
      %s78 = sadd.s32 %s77, 1
      %s79 = scalar_select %p76, %s77, %s78
      %p82 = pneg %p76
      %p83 = scmp.eq.s32.totalorder %s29, 3
      %p84 = por %p82, %p83
      %p85 = scmp.ne.s32.totalorder %s77, %s80
      %p86 = scmp.eq.s32.totalorder %s29, 0
      %p87 = por %p85, %p86
      %p88 = scmp.ne.s32.totalorder %s77, %s80
      %p89 = scmp.eq.s32.totalorder %s34, 3
      %p90 = por %p88, %p89
      %p91 = scmp.ne.s32.totalorder %s80, %s81
      %p92 = scmp.eq.s32.totalorder %s34, 0
      %p93 = por %p91, %p92
      %p94 = scmp.ne.s32.totalorder %s80, %s81
      %p95 = scmp.eq.s32.totalorder %s35, 3
      %p96 = por %p94, %p95
      %p98 = scmp.ne.s32.totalorder %s81, %s97
      %p99 = scmp.eq.s32.totalorder %s35, 0
      %p100 = por %p98, %p99
      %s102 = sadd.s32 %s101, 1
      %p105 = scmp.eq.s32.totalorder %s29, 3
      %p106 = scmp.ne.s32.totalorder %s101, %s103
      %p107 = scmp.eq.s32.totalorder %s29, 0
      %p108 = por %p106, %p107
      %p109 = scmp.ne.s32.totalorder %s101, %s103
      %p110 = scmp.eq.s32.totalorder %s34, 3
      %p111 = por %p109, %p110
      %p112 = scmp.ne.s32.totalorder %s103, %s104
      %p113 = scmp.eq.s32.totalorder %s34, 0
      %p114 = por %p112, %p113
      %p115 = scmp.ne.s32.totalorder %s103, %s104
      %p116 = scmp.eq.s32.totalorder %s35, 3
      %p117 = por %p115, %p116
      %p119 = scmp.ne.s32.totalorder %s104, %s118
      %p120 = scmp.eq.s32.totalorder %s35, 0
      %p121 = por %p119, %p120
      %s123 = sadd.s32 %s122, 1
      %p126 = scmp.eq.s32.totalorder %s29, 3
      %p127 = scmp.ne.s32.totalorder %s122, %s124
      %p128 = scmp.eq.s32.totalorder %s29, 0
      %p129 = por %p127, %p128
      %p130 = scmp.ne.s32.totalorder %s122, %s124
      %p131 = scmp.eq.s32.totalorder %s34, 3
      %p132 = por %p130, %p131
      %p133 = scmp.ne.s32.totalorder %s124, %s125
      %p134 = scmp.eq.s32.totalorder %s34, 0
      %p135 = por %p133, %p134
      %p136 = scmp.ne.s32.totalorder %s124, %s125
      %p137 = scmp.eq.s32.totalorder %s35, 3
      %p138 = por %p136, %p137
      %p140 = scmp.ne.s32.totalorder %s125, %s139
      %p141 = scmp.eq.s32.totalorder %s35, 0
      %p142 = por %p140, %p141
      %s143 = ssub.s32 %s37, %s44
      %p144 = scmp.eq.s32.totalorder %s143, 0
      %s146 = sadd.s32 %s145, 1
      %s147 = scalar_select %p144, %s145, %s146
      %p150 = pneg %p144
      %p151 = scmp.eq.s32.totalorder %s29, 3
      %p152 = por %p150, %p151
      %p153 = scmp.ne.s32.totalorder %s145, %s148
      %p154 = scmp.eq.s32.totalorder %s29, 0
      %p155 = por %p153, %p154
      %p156 = scmp.ne.s32.totalorder %s145, %s148
      %p157 = scmp.eq.s32.totalorder %s34, 3
      %p158 = por %p156, %p157
      %p159 = scmp.ne.s32.totalorder %s148, %s149
      %p160 = scmp.eq.s32.totalorder %s34, 0
      %p161 = por %p159, %p160
      %p162 = scmp.ne.s32.totalorder %s148, %s149
      %p163 = scmp.eq.s32.totalorder %s35, 3
      %p164 = por %p162, %p163
      %p166 = scmp.ne.s32.totalorder %s149, %s165
      %p167 = scmp.eq.s32.totalorder %s35, 0
      %p168 = por %p166, %p167
      %s169 = ssub.s32 %s37, %s44
      %p170 = scmp.eq.s32.totalorder %s169, 0
      %s172 = sadd.s32 %s171, 1
      %s173 = scalar_select %p170, %s171, %s172
      %p176 = pneg %p170
      %p177 = scmp.eq.s32.totalorder %s29, 3
      %p178 = por %p176, %p177
      %p179 = scmp.ne.s32.totalorder %s171, %s174
      %p180 = scmp.eq.s32.totalorder %s29, 0
      %p181 = por %p179, %p180
      %p182 = scmp.ne.s32.totalorder %s171, %s174
      %p183 = scmp.eq.s32.totalorder %s34, 3
      %p184 = por %p182, %p183
      %p185 = scmp.ne.s32.totalorder %s174, %s175
      %p186 = scmp.eq.s32.totalorder %s34, 0
      %p187 = por %p185, %p186
      %p188 = scmp.ne.s32.totalorder %s174, %s175
      %p189 = scmp.eq.s32.totalorder %s35, 3
      %p190 = por %p188, %p189
      %p192 = scmp.ne.s32.totalorder %s175, %s191
      %p193 = scmp.eq.s32.totalorder %s35, 0
      %p194 = por %p192, %p193
      %s195 = ssub.s32 %s37, %s44
      %p196 = scmp.eq.s32.totalorder %s195, 0
      %s198 = sadd.s32 %s197, 1
      %s199 = scalar_select %p196, %s197, %s198
      %p202 = pneg %p196
      %p203 = scmp.eq.s32.totalorder %s29, 3
      %p204 = por %p202, %p203
      %p205 = scmp.ne.s32.totalorder %s197, %s200
      %p206 = scmp.eq.s32.totalorder %s29, 0
      %p207 = por %p205, %p206
      %p208 = scmp.ne.s32.totalorder %s197, %s200
      %p209 = scmp.eq.s32.totalorder %s34, 3
      %p210 = por %p208, %p209
      %p211 = scmp.ne.s32.totalorder %s200, %s201
      %p212 = scmp.eq.s32.totalorder %s34, 0
      %p213 = por %p211, %p212
      %p214 = scmp.ne.s32.totalorder %s200, %s201
      %p215 = scmp.eq.s32.totalorder %s35, 3
      %p216 = por %p214, %p215
      %p218 = scmp.ne.s32.totalorder %s201, %s217
      %p219 = scmp.eq.s32.totalorder %s35, 0
      %p220 = por %p218, %p219
      %s221 = ssub.s32 %s37, %s44
      %p222 = scmp.eq.s32.totalorder %s221, 0
      %s224 = sadd.s32 %s223, 1
      %s225 = scalar_select %p222, %s223, %s224
      %p228 = pneg %p222
      %p229 = scmp.eq.s32.totalorder %s29, 3
      %p230 = por %p228, %p229
      %p231 = scmp.ne.s32.totalorder %s223, %s226
      %p232 = scmp.eq.s32.totalorder %s29, 0
      %p233 = por %p231, %p232
      %p234 = scmp.ne.s32.totalorder %s223, %s226
      %p235 = scmp.eq.s32.totalorder %s34, 3
      %p236 = por %p234, %p235
      %p237 = scmp.ne.s32.totalorder %s226, %s227
      %p238 = scmp.eq.s32.totalorder %s34, 0
      %p239 = por %p237, %p238
      %p240 = scmp.ne.s32.totalorder %s226, %s227
      %p241 = scmp.eq.s32.totalorder %s35, 3
      %p242 = por %p240, %p241
      %p244 = scmp.ne.s32.totalorder %s227, %s243
      %p245 = scmp.eq.s32.totalorder %s35, 0
      %p246 = por %p244, %p245
      %s247 = ssub.s32 %s37, %s44
      %p248 = scmp.eq.s32.totalorder %s247, 0
      %s250 = sadd.s32 %s249, 1
      %s251 = scalar_select %p248, %s249, %s250
      %p254 = pneg %p248
      %p255 = scmp.eq.s32.totalorder %s29, 3
      %p256 = por %p254, %p255
      %p257 = scmp.ne.s32.totalorder %s249, %s252
      %p258 = scmp.eq.s32.totalorder %s29, 0
      %p259 = por %p257, %p258
      %p260 = scmp.ne.s32.totalorder %s249, %s252
      %p261 = scmp.eq.s32.totalorder %s34, 3
      %p262 = por %p260, %p261
      %p263 = scmp.ne.s32.totalorder %s252, %s253
      %p264 = scmp.eq.s32.totalorder %s34, 0
      %p265 = por %p263, %p264
      %p266 = scmp.ne.s32.totalorder %s252, %s253
      %p267 = scmp.eq.s32.totalorder %s35, 3
      %p268 = por %p266, %p267
      %p270 = scmp.ne.s32.totalorder %s253, %s269
      %p271 = scmp.eq.s32.totalorder %s35, 0
      %p272 = por %p270, %p271
      %s273 = ssub.s32 %s37, %s44
      %p274 = scmp.eq.s32.totalorder %s273, 0
      %s276 = sadd.s32 %s275, 1
      %s277 = scalar_select %p274, %s275, %s276
      %p280 = pneg %p274
      %p281 = scmp.eq.s32.totalorder %s29, 3
      %p282 = por %p280, %p281
      %p283 = scmp.ne.s32.totalorder %s275, %s278
      %p284 = scmp.eq.s32.totalorder %s29, 0
      %p285 = por %p283, %p284
      %p286 = scmp.ne.s32.totalorder %s275, %s278
      %p287 = scmp.eq.s32.totalorder %s34, 3
      %p288 = por %p286, %p287
      %p289 = scmp.ne.s32.totalorder %s278, %s279
      %p290 = scmp.eq.s32.totalorder %s34, 0
      %p291 = por %p289, %p290
      %p292 = scmp.ne.s32.totalorder %s278, %s279
      %p293 = scmp.eq.s32.totalorder %s35, 3
      %p294 = por %p292, %p293
      %p296 = scmp.ne.s32.totalorder %s279, %s295
      %p297 = scmp.eq.s32.totalorder %s35, 0
      %p298 = por %p296, %p297
      %s299 = ssub.s32 %s37, %s44
      %p300 = scmp.eq.s32.totalorder %s299, 0
      %s302 = sadd.s32 %s301, 1
      %s303 = scalar_select %p300, %s301, %s302
      %p306 = pneg %p300
      %p307 = scmp.eq.s32.totalorder %s29, 3
      %p308 = por %p306, %p307
      %p309 = scmp.ne.s32.totalorder %s301, %s304
      %p310 = scmp.eq.s32.totalorder %s29, 0
      %p311 = por %p309, %p310
      %p312 = scmp.ne.s32.totalorder %s301, %s304
      %p313 = scmp.eq.s32.totalorder %s34, 3
      %p314 = por %p312, %p313
      %p315 = scmp.ne.s32.totalorder %s304, %s305
      %p316 = scmp.eq.s32.totalorder %s34, 0
      %p317 = por %p315, %p316
      %p318 = scmp.ne.s32.totalorder %s304, %s305
      %p319 = scmp.eq.s32.totalorder %s35, 3
      %p320 = por %p318, %p319
      %p322 = scmp.ne.s32.totalorder %s305, %s321
      %p323 = scmp.eq.s32.totalorder %s35, 0
      %p324 = por %p322, %p323
      %s325 = ssub.s32 %s37, %s44
      %p326 = scmp.eq.s32.totalorder %s325, 0
      %s328 = sadd.s32 %s327, 1
      %s329 = scalar_select %p326, %s327, %s328
      %p332 = pneg %p326
      %p333 = scmp.eq.s32.totalorder %s29, 3
      %p334 = por %p332, %p333
      %p335 = scmp.ne.s32.totalorder %s327, %s330
      %p336 = scmp.eq.s32.totalorder %s29, 0
      %p337 = por %p335, %p336
      %p338 = scmp.ne.s32.totalorder %s327, %s330
      %p339 = scmp.eq.s32.totalorder %s34, 3
      %p340 = por %p338, %p339
      %p341 = scmp.ne.s32.totalorder %s330, %s331
      %p342 = scmp.eq.s32.totalorder %s34, 0
      %p343 = por %p341, %p342
      %p344 = scmp.ne.s32.totalorder %s330, %s331
      %p345 = scmp.eq.s32.totalorder %s35, 3
      %p346 = por %p344, %p345
      %p348 = scmp.ne.s32.totalorder %s331, %s347
      %p349 = scmp.eq.s32.totalorder %s35, 0
      %p350 = por %p348, %p349
      %s351 = ssub.s32 %s37, %s44
      %p352 = scmp.eq.s32.totalorder %s351, 0
      %s354 = sadd.s32 %s353, 1
      %s355 = scalar_select %p352, %s353, %s354
      %p358 = pneg %p352
      %p359 = scmp.eq.s32.totalorder %s29, 3
      %p360 = por %p358, %p359
      %p361 = scmp.ne.s32.totalorder %s353, %s356
      %p362 = scmp.eq.s32.totalorder %s29, 0
      %p363 = por %p361, %p362
      %p364 = scmp.ne.s32.totalorder %s353, %s356
      %p365 = scmp.eq.s32.totalorder %s34, 3
      %p366 = por %p364, %p365
      %p367 = scmp.ne.s32.totalorder %s356, %s357
      %p368 = scmp.eq.s32.totalorder %s34, 0
      %p369 = por %p367, %p368
      %p370 = scmp.ne.s32.totalorder %s356, %s357
      %p371 = scmp.eq.s32.totalorder %s35, 3
      %p372 = por %p370, %p371
      %p374 = scmp.ne.s32.totalorder %s357, %s373
      %p375 = scmp.eq.s32.totalorder %s35, 0
      %p376 = por %p374, %p375
      %s377 = ssub.s32 %s37, %s44
      %p378 = scmp.eq.s32.totalorder %s377, 0
      %s380 = sadd.s32 %s379, 1
      %s381 = scalar_select %p378, %s379, %s380
      %p384 = pneg %p378
      %p385 = scmp.eq.s32.totalorder %s29, 3
      %p386 = por %p384, %p385
      %p387 = scmp.ne.s32.totalorder %s379, %s382
      %p388 = scmp.eq.s32.totalorder %s29, 0
      %p389 = por %p387, %p388
      %p390 = scmp.ne.s32.totalorder %s379, %s382
      %p391 = scmp.eq.s32.totalorder %s34, 3
      %p392 = por %p390, %p391
      %p393 = scmp.ne.s32.totalorder %s382, %s383
      %p394 = scmp.eq.s32.totalorder %s34, 0
      %p395 = por %p393, %p394
      %p396 = scmp.ne.s32.totalorder %s382, %s383
      %p397 = scmp.eq.s32.totalorder %s35, 3
      %p398 = por %p396, %p397
      %p400 = scmp.ne.s32.totalorder %s383, %s399
      %p401 = scmp.eq.s32.totalorder %s35, 0
      %p402 = por %p400, %p401
      %s403 = ssub.s32 %s37, %s44
      %p404 = scmp.eq.s32.totalorder %s403, 0
      %s406 = sadd.s32 %s405, 1
      %s407 = scalar_select %p404, %s405, %s406
      %p410 = pneg %p404
      %p411 = scmp.eq.s32.totalorder %s29, 3
      %p412 = por %p410, %p411
      %p413 = scmp.ne.s32.totalorder %s405, %s408
      %p414 = scmp.eq.s32.totalorder %s29, 0
      %p415 = por %p413, %p414
      %p416 = scmp.ne.s32.totalorder %s405, %s408
      %p417 = scmp.eq.s32.totalorder %s34, 3
      %p418 = por %p416, %p417
      %p419 = scmp.ne.s32.totalorder %s408, %s409
      %p420 = scmp.eq.s32.totalorder %s34, 0
      %p421 = por %p419, %p420
      %p422 = scmp.ne.s32.totalorder %s408, %s409
      %p423 = scmp.eq.s32.totalorder %s35, 3
      %p424 = por %p422, %p423
      %p426 = scmp.ne.s32.totalorder %s409, %s425
      %p427 = scmp.eq.s32.totalorder %s35, 0
      %p428 = por %p426, %p427
      %s429 = ssub.s32 %s37, %s44
      %p430 = scmp.eq.s32.totalorder %s429, 0
      %s432 = sadd.s32 %s431, 1
      %s433 = scalar_select %p430, %s431, %s432
      %p436 = pneg %p430
      %p437 = scmp.eq.s32.totalorder %s29, 3
      %p438 = por %p436, %p437
      %p439 = scmp.ne.s32.totalorder %s431, %s434
      %p440 = scmp.eq.s32.totalorder %s29, 0
      %p441 = por %p439, %p440
      %p442 = scmp.ne.s32.totalorder %s431, %s434
      %p443 = scmp.eq.s32.totalorder %s34, 3
      %p444 = por %p442, %p443
      %p445 = scmp.ne.s32.totalorder %s434, %s435
      %p446 = scmp.eq.s32.totalorder %s34, 0
      %p447 = por %p445, %p446
      %p448 = scmp.ne.s32.totalorder %s434, %s435
      %p449 = scmp.eq.s32.totalorder %s35, 3
      %p450 = por %p448, %p449
      %p452 = scmp.ne.s32.totalorder %s435, %s451
      %p453 = scmp.eq.s32.totalorder %s35, 0
      %p454 = por %p452, %p453
      %s455 = ssub.s32 %s37, %s44
      %p456 = scmp.eq.s32.totalorder %s455, 0
      %s458 = sadd.s32 %s457, 1
      %s459 = scalar_select %p456, %s457, %s458
      %p462 = pneg %p456
      %p463 = scmp.eq.s32.totalorder %s29, 3
      %p464 = por %p462, %p463
      %p465 = scmp.ne.s32.totalorder %s457, %s460
      %p466 = scmp.eq.s32.totalorder %s29, 0
      %p467 = por %p465, %p466
      %p468 = scmp.ne.s32.totalorder %s457, %s460
      %p469 = scmp.eq.s32.totalorder %s34, 3
      %p470 = por %p468, %p469
      %p471 = scmp.ne.s32.totalorder %s460, %s461
      %p472 = scmp.eq.s32.totalorder %s34, 0
      %p473 = por %p471, %p472
      %p474 = scmp.ne.s32.totalorder %s460, %s461
      %p475 = scmp.eq.s32.totalorder %s35, 3
      %p476 = por %p474, %p475
      %p478 = scmp.ne.s32.totalorder %s461, %s477
      %p479 = scmp.eq.s32.totalorder %s35, 0
      %p480 = por %p478, %p479
      %s481 = ssub.s32 %s37, %s44
      %p482 = scmp.eq.s32.totalorder %s481, 0
      %s484 = sadd.s32 %s483, 1
      %s485 = scalar_select %p482, %s483, %s484
      %p488 = pneg %p482
      %p489 = scmp.eq.s32.totalorder %s29, 3
      %p490 = por %p488, %p489
      %p491 = scmp.ne.s32.totalorder %s483, %s486
      %p492 = scmp.eq.s32.totalorder %s29, 0
      %p493 = por %p491, %p492
      %p494 = scmp.ne.s32.totalorder %s483, %s486
      %p495 = scmp.eq.s32.totalorder %s34, 3
      %p496 = por %p494, %p495
      %p497 = scmp.ne.s32.totalorder %s486, %s487
      %p498 = scmp.eq.s32.totalorder %s34, 0
      %p499 = por %p497, %p498
      %p500 = scmp.ne.s32.totalorder %s486, %s487
      %p501 = scmp.eq.s32.totalorder %s35, 3
      %p502 = por %p500, %p501
      %p504 = scmp.ne.s32.totalorder %s487, %s503
      %p505 = scmp.eq.s32.totalorder %s35, 0
      %p506 = por %p504, %p505
      %s507 = ssub.s32 %s37, %s44
      %p508 = scmp.eq.s32.totalorder %s507, 0
      %s510 = sadd.s32 %s509, 1
      %s511 = scalar_select %p508, %s509, %s510
      %p514 = pneg %p508
      %p515 = scmp.eq.s32.totalorder %s29, 3
      %p516 = por %p514, %p515
      %p517 = scmp.ne.s32.totalorder %s509, %s512
      %p518 = scmp.eq.s32.totalorder %s29, 0
      %p519 = por %p517, %p518
      %p520 = scmp.ne.s32.totalorder %s509, %s512
      %p521 = scmp.eq.s32.totalorder %s34, 3
      %p522 = por %p520, %p521
      %p523 = scmp.ne.s32.totalorder %s512, %s513
      %p524 = scmp.eq.s32.totalorder %s34, 0
      %p525 = por %p523, %p524
      %p526 = scmp.ne.s32.totalorder %s512, %s513
      %p527 = scmp.eq.s32.totalorder %s35, 3
      %p528 = por %p526, %p527
      %p530 = scmp.ne.s32.totalorder %s513, %s529
      %p531 = scmp.eq.s32.totalorder %s35, 0
      %p532 = por %p530, %p531
      %s533 = ssub.s32 %s37, %s44
      %p534 = scmp.eq.s32.totalorder %s533, 0
      %s536 = sadd.s32 %s535, 1
      %s537 = scalar_select %p534, %s535, %s536
      %p540 = pneg %p534
      %p541 = scmp.eq.s32.totalorder %s29, 3
      %p542 = por %p540, %p541
      %p543 = scmp.ne.s32.totalorder %s535, %s538
      %p544 = scmp.eq.s32.totalorder %s29, 0
      %p545 = por %p543, %p544
      %p546 = scmp.ne.s32.totalorder %s535, %s538
      %p547 = scmp.eq.s32.totalorder %s34, 3
      %p548 = por %p546, %p547
      %p549 = scmp.ne.s32.totalorder %s538, %s539
      %p550 = scmp.eq.s32.totalorder %s34, 0
      %p551 = por %p549, %p550
      %p552 = scmp.ne.s32.totalorder %s538, %s539
      %p553 = scmp.eq.s32.totalorder %s35, 3
      %p554 = por %p552, %p553
      %p556 = scmp.ne.s32.totalorder %s539, %s555
      %p557 = scmp.eq.s32.totalorder %s35, 0
      %p558 = por %p556, %p557
      %s559 = ssub.s32 %s36, %s48
      %p560 = scmp.eq.s32.totalorder %s559, 0
      %s562 = sadd.s32 %s561, 1
      %s563 = scalar_select %p560, %s561, %s562
      %p566 = pneg %p560
      %p567 = scmp.eq.s32.totalorder %s29, 3
      %p568 = por %p566, %p567
      %p569 = scmp.ne.s32.totalorder %s561, %s564
      %p570 = scmp.eq.s32.totalorder %s29, 0
      %p571 = por %p569, %p570
      %p572 = scmp.ne.s32.totalorder %s561, %s564
      %p573 = scmp.eq.s32.totalorder %s34, 3
      %p574 = por %p572, %p573
      %p575 = scmp.ne.s32.totalorder %s564, %s565
      %p576 = scmp.eq.s32.totalorder %s34, 0
      %p577 = por %p575, %p576
      %p578 = scmp.ne.s32.totalorder %s564, %s565
      %p579 = scmp.eq.s32.totalorder %s35, 3
      %p580 = por %p578, %p579
      %p582 = scmp.ne.s32.totalorder %s565, %s581
      %p583 = scmp.eq.s32.totalorder %s35, 0
      %p584 = por %p582, %p583
      %p585 = scmp.le.s32.totalorder 1, %s29
      %p586 = scmp.lt.s32.totalorder %s29, 5
      %p587 = pnand %p585, %p586
      %p588 = pneg %p587
      // Predicated region
      $region9: #{behrt_nodemo_forward.1} parent=5 // pred_check
        _
      $region10: #{behrt_nodemo_forward.1} parent=5 // pred_check_branch
        %590 = sbr.rel (%p587) target = $region12
      $region11: #{behrt_nodemo_forward.1} parent=5 // pred_region
        %s591 = ssub.s32 %s29, 1
        // Predicated region
        $region13: #{behrt_nodemo_forward.1} parent=11 // pred_check
          %p592 = pneg %p114
        $region14: #{behrt_nodemo_forward.1} parent=11 // pred_check_branch
          %594 = sbr.rel (%p592) target = $region16
        $region15: #{behrt_nodemo_forward.1} parent=11 // pred_region
          _
        $region16: #{behrt_nodemo_forward.1} parent=11 // pred_fallthru
          _
        // Predicated region
        $region17: #{behrt_nodemo_forward.1} parent=11 // pred_check
          %p595 = pneg %p135
        $region18: #{behrt_nodemo_forward.1} parent=11 // pred_check_branch
          %597 = sbr.rel (%p595) target = $region20
        $region19: #{behrt_nodemo_forward.1} parent=11 // pred_region
          _
        $region20: #{behrt_nodemo_forward.1} parent=11 // pred_fallthru
          _
      $region12: #{behrt_nodemo_forward.1} parent=5 // pred_fallthru
        _
      %p598 = scmp.lt.s32.totalorder %s29, 4
      // Predicated region
      $region21: #{behrt_nodemo_forward.1} parent=5 // pred_check
        %p599 = pneg %p598
      $region22: #{behrt_nodemo_forward.1} parent=5 // pred_check_branch
        %601 = sbr.rel (%p599) target = $region24
      $region23: #{behrt_nodemo_forward.1} parent=5 // pred_region
        // Predicated region
        $region25: #{behrt_nodemo_forward.1} parent=23 // pred_check
          %p602 = pneg %p61
        $region26: #{behrt_nodemo_forward.1} parent=23 // pred_check_branch
          %604 = sbr.rel (%p602) target = $region28
        $region27: #{behrt_nodemo_forward.1} parent=23 // pred_region
          %p605 = scmp.lt.s32.totalorder %s36, 1
          %s606 = scalar_select %p605, %s36, 1
          %s607 = smul.addr %s606, 8
          %s608 = scalar_lea.vmem %s0, %s607
        $region28: #{behrt_nodemo_forward.1} parent=23 // pred_fallthru
          _
        // Predicated region
        $region29: #{behrt_nodemo_forward.1} parent=23 // pred_check
          %p609 = pneg %p87
        $region30: #{behrt_nodemo_forward.1} parent=23 // pred_check_branch
          %611 = sbr.rel (%p609) target = $region32
        $region31: #{behrt_nodemo_forward.1} parent=23 // pred_region
          %p612 = scmp.lt.s32.totalorder %s36, 1
          %s613 = scalar_select %p612, %s36, 1
          %s614 = scalar_lea.vmem %s1, %s613
        $region32: #{behrt_nodemo_forward.1} parent=23 // pred_fallthru
          _
        // Predicated region
        $region33: #{behrt_nodemo_forward.1} parent=23 // pred_check
          %p615 = pneg %p155
        $region34: #{behrt_nodemo_forward.1} parent=23 // pred_check_branch
          %617 = sbr.rel (%p615) target = $region36
        $region35: #{behrt_nodemo_forward.1} parent=23 // pred_region
          %p618 = scmp.lt.s32.totalorder %s37, 1
          %s619 = scalar_select %p618, %s37, 1
          %s620 = smul.addr %s619, 64
          %s621 = smul.addr %s620, 4
          %s622 = scalar_lea.vmem %s4, %s621
        $region36: #{behrt_nodemo_forward.1} parent=23 // pred_fallthru
          _
        // Predicated region
        $region37: #{behrt_nodemo_forward.1} parent=23 // pred_check
          %p623 = pneg %p181
        $region38: #{behrt_nodemo_forward.1} parent=23 // pred_check_branch
          %625 = sbr.rel (%p623) target = $region40
        $region39: #{behrt_nodemo_forward.1} parent=23 // pred_region
          %p626 = scmp.lt.s32.totalorder %s37, 1
          %s627 = scalar_select %p626, %s37, 1
          %s628 = smul.addr %s627, 4
          %s629 = scalar_lea.vmem %s5, %s628
        $region40: #{behrt_nodemo_forward.1} parent=23 // pred_fallthru
          _
        // Predicated region
        $region41: #{behrt_nodemo_forward.1} parent=23 // pred_check
          %p630 = pneg %p207
        $region42: #{behrt_nodemo_forward.1} parent=23 // pred_check_branch
          %632 = sbr.rel (%p630) target = $region44
        $region43: #{behrt_nodemo_forward.1} parent=23 // pred_region
          %p633 = scmp.lt.s32.totalorder %s37, 1
          %s634 = scalar_select %p633, %s37, 1
          %s635 = smul.addr %s634, 64
          %s636 = smul.addr %s635, 4
          %s637 = scalar_lea.vmem %s6, %s636
        $region44: #{behrt_nodemo_forward.1} parent=23 // pred_fallthru
          _
        // Predicated region
        $region45: #{behrt_nodemo_forward.1} parent=23 // pred_check
          %p638 = pneg %p233
        $region46: #{behrt_nodemo_forward.1} parent=23 // pred_check_branch
          %640 = sbr.rel (%p638) target = $region48
        $region47: #{behrt_nodemo_forward.1} parent=23 // pred_region
          %p641 = scmp.lt.s32.totalorder %s37, 1
          %s642 = scalar_select %p641, %s37, 1
          %s643 = smul.addr %s642, 4
          %s644 = scalar_lea.vmem %s7, %s643
        $region48: #{behrt_nodemo_forward.1} parent=23 // pred_fallthru
          _
        // Predicated region
        $region49: #{behrt_nodemo_forward.1} parent=23 // pred_check
          %p645 = pneg %p259
        $region50: #{behrt_nodemo_forward.1} parent=23 // pred_check_branch
          %647 = sbr.rel (%p645) target = $region52
        $region51: #{behrt_nodemo_forward.1} parent=23 // pred_region
          %p648 = scmp.lt.s32.totalorder %s37, 1
          %s649 = scalar_select %p648, %s37, 1
          %s650 = smul.addr %s649, 64
          %s651 = smul.addr %s650, 4
          %s652 = scalar_lea.vmem %s8, %s651
        $region52: #{behrt_nodemo_forward.1} parent=23 // pred_fallthru
          _
        // Predicated region
        $region53: #{behrt_nodemo_forward.1} parent=23 // pred_check
          %p653 = pneg %p285
        $region54: #{behrt_nodemo_forward.1} parent=23 // pred_check_branch
          %655 = sbr.rel (%p653) target = $region56
        $region55: #{behrt_nodemo_forward.1} parent=23 // pred_region
          %p656 = scmp.lt.s32.totalorder %s37, 1
          %s657 = scalar_select %p656, %s37, 1
          %s658 = smul.addr %s657, 4
          %s659 = scalar_lea.vmem %s9, %s658
        $region56: #{behrt_nodemo_forward.1} parent=23 // pred_fallthru
          _
        // Predicated region
        $region57: #{behrt_nodemo_forward.1} parent=23 // pred_check
          %p660 = pneg %p311
        $region58: #{behrt_nodemo_forward.1} parent=23 // pred_check_branch
          %662 = sbr.rel (%p660) target = $region60
        $region59: #{behrt_nodemo_forward.1} parent=23 // pred_region
          %p663 = scmp.lt.s32.totalorder %s37, 1
          %s664 = scalar_select %p663, %s37, 1
          %s665 = smul.addr %s664, 16
          %s666 = smul.addr %s665, 4
          %s667 = scalar_lea.vmem %s10, %s666
        $region60: #{behrt_nodemo_forward.1} parent=23 // pred_fallthru
          _
        // Predicated region
        $region61: #{behrt_nodemo_forward.1} parent=23 // pred_check
          %p668 = pneg %p337
        $region62: #{behrt_nodemo_forward.1} parent=23 // pred_check_branch
          %670 = sbr.rel (%p668) target = $region64
        $region63: #{behrt_nodemo_forward.1} parent=23 // pred_region
          %p671 = scmp.lt.s32.totalorder %s37, 1
          %s672 = scalar_select %p671, %s37, 1
          %s673 = scalar_lea.vmem %s11, %s672
        $region64: #{behrt_nodemo_forward.1} parent=23 // pred_fallthru
          _
        // Predicated region
        $region65: #{behrt_nodemo_forward.1} parent=23 // pred_check
          %p674 = pneg %p363
        $region66: #{behrt_nodemo_forward.1} parent=23 // pred_check_branch
          %676 = sbr.rel (%p674) target = $region68
        $region67: #{behrt_nodemo_forward.1} parent=23 // pred_region
          %p677 = scmp.lt.s32.totalorder %s37, 1
          %s678 = scalar_select %p677, %s37, 1
          %s679 = scalar_lea.vmem %s12, %s678
        $region68: #{behrt_nodemo_forward.1} parent=23 // pred_fallthru
          _
        // Predicated region
        $region69: #{behrt_nodemo_forward.1} parent=23 // pred_check
          %p680 = pneg %p389
        $region70: #{behrt_nodemo_forward.1} parent=23 // pred_check_branch
          %682 = sbr.rel (%p680) target = $region72
        $region71: #{behrt_nodemo_forward.1} parent=23 // pred_region
          %p683 = scmp.lt.s32.totalorder %s37, 1
          %s684 = scalar_select %p683, %s37, 1
          %s685 = scalar_lea.vmem %s13, %s684
        $region72: #{behrt_nodemo_forward.1} parent=23 // pred_fallthru
          _
        // Predicated region
        $region73: #{behrt_nodemo_forward.1} parent=23 // pred_check
          %p686 = pneg %p415
        $region74: #{behrt_nodemo_forward.1} parent=23 // pred_check_branch
          %688 = sbr.rel (%p686) target = $region76
        $region75: #{behrt_nodemo_forward.1} parent=23 // pred_region
          %p689 = scmp.lt.s32.totalorder %s37, 1
          %s690 = scalar_select %p689, %s37, 1
          %s691 = smul.addr %s690, 32
          %s692 = smul.addr %s691, 4
          %s693 = scalar_lea.vmem %s14, %s692
        $region76: #{behrt_nodemo_forward.1} parent=23 // pred_fallthru
          _
        // Predicated region
        $region77: #{behrt_nodemo_forward.1} parent=23 // pred_check
          %p694 = pneg %p441
        $region78: #{behrt_nodemo_forward.1} parent=23 // pred_check_branch
          %696 = sbr.rel (%p694) target = $region80
        $region79: #{behrt_nodemo_forward.1} parent=23 // pred_region
          %p697 = scmp.lt.s32.totalorder %s37, 1
          %s698 = scalar_select %p697, %s37, 1
          %s699 = smul.addr %s698, 2
          %s700 = scalar_lea.vmem %s15, %s699
        $region80: #{behrt_nodemo_forward.1} parent=23 // pred_fallthru
          _
        // Predicated region
        $region81: #{behrt_nodemo_forward.1} parent=23 // pred_check
          %p701 = pneg %p467
        $region82: #{behrt_nodemo_forward.1} parent=23 // pred_check_branch
          %703 = sbr.rel (%p701) target = $region84
        $region83: #{behrt_nodemo_forward.1} parent=23 // pred_region
          %p704 = scmp.lt.s32.totalorder %s37, 1
          %s705 = scalar_select %p704, %s37, 1
          %s706 = smul.addr %s705, 32
          %s707 = smul.addr %s706, 4
          %s708 = scalar_lea.vmem %s16, %s707
        $region84: #{behrt_nodemo_forward.1} parent=23 // pred_fallthru
          _
        // Predicated region
        $region85: #{behrt_nodemo_forward.1} parent=23 // pred_check
          %p709 = pneg %p493
        $region86: #{behrt_nodemo_forward.1} parent=23 // pred_check_branch
          %711 = sbr.rel (%p709) target = $region88
        $region87: #{behrt_nodemo_forward.1} parent=23 // pred_region
          %p712 = scmp.lt.s32.totalorder %s37, 1
          %s713 = scalar_select %p712, %s37, 1
          %s714 = scalar_lea.vmem %s17, %s713
        $region88: #{behrt_nodemo_forward.1} parent=23 // pred_fallthru
          _
        // Predicated region
        $region89: #{behrt_nodemo_forward.1} parent=23 // pred_check
          %p715 = pneg %p519
        $region90: #{behrt_nodemo_forward.1} parent=23 // pred_check_branch
          %717 = sbr.rel (%p715) target = $region92
        $region91: #{behrt_nodemo_forward.1} parent=23 // pred_region
          %p718 = scmp.lt.s32.totalorder %s37, 1
          %s719 = scalar_select %p718, %s37, 1
          %s720 = scalar_lea.vmem %s18, %s719
        $region92: #{behrt_nodemo_forward.1} parent=23 // pred_fallthru
          _
        // Predicated region
        $region93: #{behrt_nodemo_forward.1} parent=23 // pred_check
          %p721 = pneg %p545
        $region94: #{behrt_nodemo_forward.1} parent=23 // pred_check_branch
          %723 = sbr.rel (%p721) target = $region96
        $region95: #{behrt_nodemo_forward.1} parent=23 // pred_region
          %p724 = scmp.lt.s32.totalorder %s37, 1
          %s725 = scalar_select %p724, %s37, 1
          %s726 = scalar_lea.vmem %s19, %s725
        $region96: #{behrt_nodemo_forward.1} parent=23 // pred_fallthru
          _
      $region24: #{behrt_nodemo_forward.1} parent=5 // pred_fallthru
        _
      %p727 = scmp.le.s32.totalorder 1, %s29
      %p728 = scmp.lt.s32.totalorder %s29, 5
      %p729 = pnand %p727, %p728
      %p730 = pneg %p729
      // Predicated region
      $region97: #{behrt_nodemo_forward.1} parent=5 // pred_check
        _
      $region98: #{behrt_nodemo_forward.1} parent=5 // pred_check_branch
        %732 = sbr.rel (%p729) target = $region100
      $region99: #{behrt_nodemo_forward.1} parent=5 // pred_region
        %s733 = ssub.s32 %s29, 1
        %p734 = scmp.lt.s32.totalorder %s38, 1
        %s735 = scalar_select %p734, %s38, 1
        %s736 = smul.addr %s735, 8
        %s737 = scalar_lea.vmem %s0, %s736
        %p738 = pneg %p67
        %p739 = pneg %p64
        %p740 = scmp.lt.s32.totalorder %s38, 1
        %s741 = scalar_select %p740, %s38, 1
        %s742 = scalar_lea.vmem %s1, %s741
        %p743 = pneg %p93
        %p744 = pneg %p90
        %p745 = pneg %p114
        %p746 = pneg %p111
        %p747 = pneg %p135
        %p748 = pneg %p132
        %p749 = scmp.lt.s32.totalorder %s39, 1
        %s750 = scalar_select %p749, %s39, 1
        %s751 = smul.addr %s750, 64
        %s752 = smul.addr %s751, 4
        %s753 = scalar_lea.vmem %s4, %s752
        %p754 = pneg %p161
        %p755 = pneg %p158
        %p756 = scmp.lt.s32.totalorder %s39, 1
        %s757 = scalar_select %p756, %s39, 1
        %s758 = smul.addr %s757, 4
        %s759 = scalar_lea.vmem %s5, %s758
        %p760 = pneg %p187
        %p761 = pneg %p184
        %p762 = scmp.lt.s32.totalorder %s39, 1
        %s763 = scalar_select %p762, %s39, 1
        %s764 = smul.addr %s763, 64
        %s765 = smul.addr %s764, 4
        %s766 = scalar_lea.vmem %s6, %s765
        %p767 = pneg %p213
        %p768 = pneg %p210
        %p769 = scmp.lt.s32.totalorder %s39, 1
        %s770 = scalar_select %p769, %s39, 1
        %s771 = smul.addr %s770, 4
        %s772 = scalar_lea.vmem %s7, %s771
        %p773 = pneg %p239
        %p774 = pneg %p236
        %p775 = scmp.lt.s32.totalorder %s39, 1
        %s776 = scalar_select %p775, %s39, 1
        %s777 = smul.addr %s776, 64
        %s778 = smul.addr %s777, 4
        %s779 = scalar_lea.vmem %s8, %s778
        %p780 = pneg %p265
        %p781 = pneg %p262
        %p782 = scmp.lt.s32.totalorder %s39, 1
        %s783 = scalar_select %p782, %s39, 1
        %s784 = smul.addr %s783, 4
        %s785 = scalar_lea.vmem %s9, %s784
        %p786 = pneg %p291
        %p787 = pneg %p288
        %p788 = scmp.lt.s32.totalorder %s39, 1
        %s789 = scalar_select %p788, %s39, 1
        %s790 = smul.addr %s789, 16
        %s791 = smul.addr %s790, 4
        %s792 = scalar_lea.vmem %s10, %s791
        %p793 = pneg %p317
        %p794 = pneg %p314
        %p795 = scmp.lt.s32.totalorder %s39, 1
        %s796 = scalar_select %p795, %s39, 1
        %s797 = scalar_lea.vmem %s11, %s796
        %p798 = pneg %p343
        %p799 = pneg %p340
        %p800 = scmp.lt.s32.totalorder %s39, 1
        %s801 = scalar_select %p800, %s39, 1
        %s802 = scalar_lea.vmem %s12, %s801
        %p803 = pneg %p369
        %p804 = pneg %p366
        %p805 = scmp.lt.s32.totalorder %s39, 1
        %s806 = scalar_select %p805, %s39, 1
        %s807 = scalar_lea.vmem %s13, %s806
        %p808 = pneg %p395
        %p809 = pneg %p392
        %p810 = scmp.lt.s32.totalorder %s39, 1
        %s811 = scalar_select %p810, %s39, 1
        %s812 = smul.addr %s811, 32
        %s813 = smul.addr %s812, 4
        %s814 = scalar_lea.vmem %s14, %s813
        %p815 = pneg %p421
        %p816 = pneg %p418
        %p817 = scmp.lt.s32.totalorder %s39, 1
        %s818 = scalar_select %p817, %s39, 1
        %s819 = smul.addr %s818, 2
        %s820 = scalar_lea.vmem %s15, %s819
        %p821 = pneg %p447
        %p822 = pneg %p444
        %p823 = scmp.lt.s32.totalorder %s39, 1
        %s824 = scalar_select %p823, %s39, 1
        %s825 = smul.addr %s824, 32
        %s826 = smul.addr %s825, 4
        %s827 = scalar_lea.vmem %s16, %s826
        %p828 = pneg %p473
        %p829 = pneg %p470
        %p830 = scmp.lt.s32.totalorder %s39, 1
        %s831 = scalar_select %p830, %s39, 1
        %s832 = scalar_lea.vmem %s17, %s831
        %p833 = pneg %p499
        %p834 = pneg %p496
        %p835 = scmp.lt.s32.totalorder %s39, 1
        %s836 = scalar_select %p835, %s39, 1
        %s837 = scalar_lea.vmem %s18, %s836
        %p838 = pneg %p525
        %p839 = pneg %p522
        %p840 = scmp.lt.s32.totalorder %s39, 1
        %s841 = scalar_select %p840, %s39, 1
        %s842 = scalar_lea.vmem %s19, %s841
        %p843 = pneg %p551
        %p844 = pneg %p548
        %p845 = pneg %p577
        %p846 = pneg %p574
        %s847 = sand.u32 %s564, 1
        %s848 = scalar_lea.sflag [#allocation4], %s847
        %s849 = sand.u32 %s564, 1
        %s850 = scalar_lea.vmem [#allocation3], %s849
        %p851 = scmp.lt.s32.totalorder %s38, 1
        %s852 = scalar_select %p851, %s38, 1
        %s853 = smul.addr %s852, 8
        %s854 = scalar_lea.vmem %s0, %s853
        %p855 = scmp.lt.s32.totalorder %s38, 1
        %s856 = scalar_select %p855, %s38, 1
        %s857 = scalar_lea.vmem %s1, %s856
        %p858 = scmp.lt.s32.totalorder %s39, 1
        %s859 = scalar_select %p858, %s39, 1
        %s860 = smul.addr %s859, 64
        %s861 = smul.addr %s860, 4
        %s862 = scalar_lea.vmem %s4, %s861
        %p863 = scmp.lt.s32.totalorder %s39, 1
        %s864 = scalar_select %p863, %s39, 1
        %s865 = smul.addr %s864, 4
        %s866 = scalar_lea.vmem %s5, %s865
        %p867 = scmp.lt.s32.totalorder %s39, 1
        %s868 = scalar_select %p867, %s39, 1
        %s869 = smul.addr %s868, 64
        %s870 = smul.addr %s869, 4
        %s871 = scalar_lea.vmem %s6, %s870
        %p872 = scmp.lt.s32.totalorder %s39, 1
        %s873 = scalar_select %p872, %s39, 1
        %s874 = smul.addr %s873, 4
        %s875 = scalar_lea.vmem %s7, %s874
        %p876 = scmp.lt.s32.totalorder %s39, 1
        %s877 = scalar_select %p876, %s39, 1
        %s878 = smul.addr %s877, 64
        %s879 = smul.addr %s878, 4
        %s880 = scalar_lea.vmem %s8, %s879
        %p881 = scmp.lt.s32.totalorder %s39, 1
        %s882 = scalar_select %p881, %s39, 1
        %s883 = smul.addr %s882, 4
        %s884 = scalar_lea.vmem %s9, %s883
        %p885 = scmp.lt.s32.totalorder %s39, 1
        %s886 = scalar_select %p885, %s39, 1
        %s887 = smul.addr %s886, 16
        %s888 = smul.addr %s887, 4
        %s889 = scalar_lea.vmem %s10, %s888
        %p890 = scmp.lt.s32.totalorder %s39, 1
        %s891 = scalar_select %p890, %s39, 1
        %s892 = scalar_lea.vmem %s11, %s891
        %p893 = scmp.lt.s32.totalorder %s39, 1
        %s894 = scalar_select %p893, %s39, 1
        %s895 = scalar_lea.vmem %s12, %s894
        %p896 = scmp.lt.s32.totalorder %s39, 1
        %s897 = scalar_select %p896, %s39, 1
        %s898 = scalar_lea.vmem %s13, %s897
        %p899 = scmp.lt.s32.totalorder %s39, 1
        %s900 = scalar_select %p899, %s39, 1
        %s901 = smul.addr %s900, 32
        %s902 = smul.addr %s901, 4
        %s903 = scalar_lea.vmem %s14, %s902
        %p904 = scmp.lt.s32.totalorder %s39, 1
        %s905 = scalar_select %p904, %s39, 1
        %s906 = smul.addr %s905, 2
        %s907 = scalar_lea.vmem %s15, %s906
        %p908 = scmp.lt.s32.totalorder %s39, 1
        %s909 = scalar_select %p908, %s39, 1
        %s910 = smul.addr %s909, 32
        %s911 = smul.addr %s910, 4
        %s912 = scalar_lea.vmem %s16, %s911
        %p913 = scmp.lt.s32.totalorder %s39, 1
        %s914 = scalar_select %p913, %s39, 1
        %s915 = scalar_lea.vmem %s17, %s914
        %p916 = scmp.lt.s32.totalorder %s39, 1
        %s917 = scalar_select %p916, %s39, 1
        %s918 = scalar_lea.vmem %s18, %s917
        %p919 = scmp.lt.s32.totalorder %s39, 1
        %s920 = scalar_select %p919, %s39, 1
        %s921 = scalar_lea.vmem %s19, %s920
        %p923 = scmp.eq.s32.totalorder %s39, 0
        // Predicated region
        $region101: #{behrt_nodemo_forward.1} parent=99 // pred_check
          %p924 = pneg %p923
        $region102: #{behrt_nodemo_forward.1} parent=99 // pred_check_branch
          %926 = sbr.rel (%p924) target = $region104
        $region103: #{behrt_nodemo_forward.1} parent=99 // pred_region
          %v927 = vld [vmem:[%s854] sm:$0xff]
          %v928 = vld [vmem:[%s2] sm:$0x1]
          %v929 = vld [vmem:[%s3] sm:$0x1]
          %930 = vadd.xlane.f32.xlu0 %v927
          %v931 = vpop.xlane.xlu0 %930
          %v932 = vrcp.pop 128.0
          %v933 = vmul.f32 128.0, %v932
          %v934 = vsub.f32 1.0, %v933
          %v935 = vmul.f32 %v932, %v934
          %v936 = vadd.f32 %v932, %v935
          %vm937 = vweird.f32 %v932
          %v938 = vsel %vm937, %v932, %v936
          %v939 = vmul.f32 %v931, %v938
          %v940 = vsub.f32 %v927, %v939
          %v941 = vmul.f32 %v940, %v940
          %942 = vadd.xlane.f32.xlu0 %v941
          %v943 = vpop.xlane.xlu0 %942
          %v944 = vmul.f32 %v943, %v938
          %v945 = vadd.f32 %v944, 1e-12
          %v946 = vrsqrt.pop %v945
          %v947 = vmul.f32 %v946, %v945
          %v948 = vmul.f32 %v947, %v946
          %v949 = vmul.f32 0.5, %v948
          %v950 = vsub.f32 1.5, %v949
          %v951 = vmul.f32 %v946, %v950
          %vm952 = vweird.f32 %v945
          %vm953 = vweird.f32 %v946
          %vm954 = vmor %vm952, %vm953
          %v955 = vsel %vm954, %v946, %v951
          %v956 = vmul.f32 %v940, %v955
          %v958 = vperm.slane %v928, 0
          %v960 = vmul.f32 %v956, %v958
          %v962 = vperm.slane %v929, 0
          %v964 = vadd.f32 %v960, %v962
          %965 = vst [vmem:[#allocation2] sm:$0xff] %v964
        $region104: #{behrt_nodemo_forward.1} parent=99 // pred_fallthru
          _
        %v966 = vld [vmem:[#allocation2] sm:$0xff]
        %v967 = vpack.c.bf16 %v966, %v966
        %v968 = vld [vmem:[%s857] sm:$0x1]
        %v969 = vld [vmem:[%s862] sm:$0xf]
        %v970 = vld [vmem:[%s862 + $0x4] sm:$0xf]
        %v971 = vld [vmem:[%s862 + $0x8] sm:$0xf]
        %v972 = vld [vmem:[%s862 + $0xc] sm:$0xf]
        %v973 = vld [vmem:[%s862 + $0x10] sm:$0xf]
        %v974 = vld [vmem:[%s862 + $0x14] sm:$0xf]
        %v975 = vld [vmem:[%s862 + $0x18] sm:$0xf]
        %v976 = vld [vmem:[%s862 + $0x1c] sm:$0xf]
        %v977 = vld [vmem:[%s862 + $0x20] sm:$0xf]
        %v978 = vld [vmem:[%s862 + $0x24] sm:$0xf]
        %v979 = vld [vmem:[%s862 + $0x28] sm:$0xf]
        %v980 = vld [vmem:[%s862 + $0x2c] sm:$0xf]
        %v981 = vld [vmem:[%s862 + $0x30] sm:$0xf]
        %v982 = vld [vmem:[%s862 + $0x34] sm:$0xf]
        %v983 = vld [vmem:[%s862 + $0x38] sm:$0xf]
        %v984 = vld [vmem:[%s862 + $0x3c] sm:$0xf]
        %v985 = vld [vmem:[%s862 + $0x40] sm:$0xf]
        %v986 = vld [vmem:[%s862 + $0x44] sm:$0xf]
        %v987 = vld [vmem:[%s862 + $0x48] sm:$0xf]
        %v988 = vld [vmem:[%s862 + $0x4c] sm:$0xf]
        %v989 = vld [vmem:[%s862 + $0x50] sm:$0xf]
        %v990 = vld [vmem:[%s862 + $0x54] sm:$0xf]
        %v991 = vld [vmem:[%s862 + $0x58] sm:$0xf]
        %v992 = vld [vmem:[%s862 + $0x5c] sm:$0xf]
        %v993 = vld [vmem:[%s862 + $0x60] sm:$0xf]
        %v994 = vld [vmem:[%s862 + $0x64] sm:$0xf]
        %v995 = vld [vmem:[%s862 + $0x68] sm:$0xf]
        %v996 = vld [vmem:[%s862 + $0x6c] sm:$0xf]
        %v997 = vld [vmem:[%s862 + $0x70] sm:$0xf]
        %v998 = vld [vmem:[%s862 + $0x74] sm:$0xf]
        %v999 = vld [vmem:[%s862 + $0x78] sm:$0xf]
        %v1000 = vld [vmem:[%s862 + $0x7c] sm:$0xf]
        %v1001 = vld [vmem:[%s862 + $0x80] sm:$0xf]
        %v1002 = vld [vmem:[%s862 + $0x84] sm:$0xf]
        %v1003 = vld [vmem:[%s862 + $0x88] sm:$0xf]
        %v1004 = vld [vmem:[%s862 + $0x8c] sm:$0xf]
        %v1005 = vld [vmem:[%s862 + $0x90] sm:$0xf]
        %v1006 = vld [vmem:[%s862 + $0x94] sm:$0xf]
        %v1007 = vld [vmem:[%s862 + $0x98] sm:$0xf]
        %v1008 = vld [vmem:[%s862 + $0x9c] sm:$0xf]
        %v1009 = vld [vmem:[%s862 + $0xa0] sm:$0xf]
        %v1010 = vld [vmem:[%s862 + $0xa4] sm:$0xf]
        %v1011 = vld [vmem:[%s862 + $0xa8] sm:$0xf]
        %v1012 = vld [vmem:[%s862 + $0xac] sm:$0xf]
        %v1013 = vld [vmem:[%s862 + $0xb0] sm:$0xf]
        %v1014 = vld [vmem:[%s862 + $0xb4] sm:$0xf]
        %v1015 = vld [vmem:[%s862 + $0xb8] sm:$0xf]
        %v1016 = vld [vmem:[%s862 + $0xbc] sm:$0xf]
        %v1017 = vld [vmem:[%s862 + $0xc0] sm:$0xf]
        %v1018 = vld [vmem:[%s862 + $0xc4] sm:$0xf]
        %v1019 = vld [vmem:[%s862 + $0xc8] sm:$0xf]
        %v1020 = vld [vmem:[%s862 + $0xcc] sm:$0xf]
        %v1021 = vld [vmem:[%s862 + $0xd0] sm:$0xf]
        %v1022 = vld [vmem:[%s862 + $0xd4] sm:$0xf]
        %v1023 = vld [vmem:[%s862 + $0xd8] sm:$0xf]
        %v1024 = vld [vmem:[%s862 + $0xdc] sm:$0xf]
        %v1025 = vld [vmem:[%s862 + $0xe0] sm:$0xf]
        %v1026 = vld [vmem:[%s862 + $0xe4] sm:$0xf]
        %v1027 = vld [vmem:[%s862 + $0xe8] sm:$0xf]
        %v1028 = vld [vmem:[%s862 + $0xec] sm:$0xf]
        %v1029 = vld [vmem:[%s862 + $0xf0] sm:$0xf]
        %v1030 = vld [vmem:[%s862 + $0xf4] sm:$0xf]
        %v1031 = vld [vmem:[%s862 + $0xf8] sm:$0xf]
        %v1032 = vld [vmem:[%s862 + $0xfc] sm:$0xf]
        %v1033 = vld [vmem:[%s866] sm:$0x1]
        %v1034 = vld [vmem:[%s866 + $0x1] sm:$0x1]
        %v1035 = vld [vmem:[%s866 + $0x2] sm:$0x1]
        %v1036 = vld [vmem:[%s866 + $0x3] sm:$0x1]
        %v1041 = vperm.slane %v1033, 0
        %v1042 = vperm.slane %v1034, 0
        %v1043 = vperm.slane %v1035, 0
        %v1044 = vperm.slane %v1036, 0
        %v1065 = vunpack.c.l.b16 %v969
        %v1066 = vunpack.c.l.b16 %v970
        %v1067 = vunpack.c.l.b16 %v971
        %v1068 = vunpack.c.l.b16 %v972
        %v1069 = vunpack.c.l.b16 %v973
        %v1070 = vunpack.c.l.b16 %v974
        %v1071 = vunpack.c.l.b16 %v975
        %v1072 = vunpack.c.l.b16 %v976
        %v1073 = vunpack.c.l.b16 %v977
        %v1074 = vunpack.c.l.b16 %v978
        %v1075 = vunpack.c.l.b16 %v979
        %v1076 = vunpack.c.l.b16 %v980
        %v1077 = vunpack.c.l.b16 %v981
        %v1078 = vunpack.c.l.b16 %v982
        %v1079 = vunpack.c.l.b16 %v983
        %v1080 = vunpack.c.l.b16 %v984
        %v1081 = vpack.c.b16 %v1066, %v1065
        %v1082 = vpack.c.b16 %v1068, %v1067
        %v1083 = vpack.c.b16 %v1070, %v1069
        %v1084 = vpack.c.b16 %v1072, %v1071
        %v1085 = vpack.c.b16 %v1074, %v1073
        %v1086 = vpack.c.b16 %v1076, %v1075
        %v1087 = vpack.c.b16 %v1078, %v1077
        %v1088 = vpack.c.b16 %v1080, %v1079
        %1097 = vmatpush.bf16.msra.mxu0 %v1088
        %1098 = vmatpush.bf16.msra.mxu0 %v1087
        %1099 = vmatpush.bf16.msra.mxu0 %v1086
        %1100 = vmatpush.bf16.msra.mxu0 %v1085
        %1101 = vmatpush.bf16.msra.mxu0 %v1084
        %1102 = vmatpush.bf16.msra.mxu0 %v1083
        %1103 = vmatpush.bf16.msra.mxu0 %v1082
        %1104 = vmatpush.bf16.msra.mxu0 %v1081
        %1105 = vmatmul.bf16.gmra.mxu0 %v967
        %v1106 = vpop.f32.mrf.mxu0
        %v1107 = vadd.f32 %v1041, %v1106
        %v1108 = vpop.f32.mrf.mxu0
        %1109 = vdwg.mxu0
        %v1126 = vunpack.c.l.b16 %v985
        %v1127 = vunpack.c.l.b16 %v986
        %v1128 = vunpack.c.l.b16 %v987
        %v1129 = vunpack.c.l.b16 %v988
        %v1130 = vunpack.c.l.b16 %v989
        %v1131 = vunpack.c.l.b16 %v990
        %v1132 = vunpack.c.l.b16 %v991
        %v1133 = vunpack.c.l.b16 %v992
        %v1134 = vunpack.c.l.b16 %v993
        %v1135 = vunpack.c.l.b16 %v994
        %v1136 = vunpack.c.l.b16 %v995
        %v1137 = vunpack.c.l.b16 %v996
        %v1138 = vunpack.c.l.b16 %v997
        %v1139 = vunpack.c.l.b16 %v998
        %v1140 = vunpack.c.l.b16 %v999
        %v1141 = vunpack.c.l.b16 %v1000
        %v1142 = vpack.c.b16 %v1127, %v1126
        %v1143 = vpack.c.b16 %v1129, %v1128
        %v1144 = vpack.c.b16 %v1131, %v1130
        %v1145 = vpack.c.b16 %v1133, %v1132
        %v1146 = vpack.c.b16 %v1135, %v1134
        %v1147 = vpack.c.b16 %v1137, %v1136
        %v1148 = vpack.c.b16 %v1139, %v1138
        %v1149 = vpack.c.b16 %v1141, %v1140
        %1158 = vmatpush.bf16.msra.mxu0 %v1149
        %1159 = vmatpush.bf16.msra.mxu0 %v1148
        %1160 = vmatpush.bf16.msra.mxu0 %v1147
        %1161 = vmatpush.bf16.msra.mxu0 %v1146
        %1162 = vmatpush.bf16.msra.mxu0 %v1145
        %1163 = vmatpush.bf16.msra.mxu0 %v1144
        %1164 = vmatpush.bf16.msra.mxu0 %v1143
        %1165 = vmatpush.bf16.msra.mxu0 %v1142
        %1166 = vmatmul.bf16.gmra.mxu0 %v967
        %v1167 = vpop.f32.mrf.mxu0
        %v1168 = vadd.f32 %v1042, %v1167
        %v1169 = vpop.f32.mrf.mxu0
        %1170 = vdwg.mxu0
        %v1187 = vunpack.c.l.b16 %v1001
        %v1188 = vunpack.c.l.b16 %v1002
        %v1189 = vunpack.c.l.b16 %v1003
        %v1190 = vunpack.c.l.b16 %v1004
        %v1191 = vunpack.c.l.b16 %v1005
        %v1192 = vunpack.c.l.b16 %v1006
        %v1193 = vunpack.c.l.b16 %v1007
        %v1194 = vunpack.c.l.b16 %v1008
        %v1195 = vunpack.c.l.b16 %v1009
        %v1196 = vunpack.c.l.b16 %v1010
        %v1197 = vunpack.c.l.b16 %v1011
        %v1198 = vunpack.c.l.b16 %v1012
        %v1199 = vunpack.c.l.b16 %v1013
        %v1200 = vunpack.c.l.b16 %v1014
        %v1201 = vunpack.c.l.b16 %v1015
        %v1202 = vunpack.c.l.b16 %v1016
        %v1203 = vpack.c.b16 %v1188, %v1187
        %v1204 = vpack.c.b16 %v1190, %v1189
        %v1205 = vpack.c.b16 %v1192, %v1191
        %v1206 = vpack.c.b16 %v1194, %v1193
        %v1207 = vpack.c.b16 %v1196, %v1195
        %v1208 = vpack.c.b16 %v1198, %v1197
        %v1209 = vpack.c.b16 %v1200, %v1199
        %v1210 = vpack.c.b16 %v1202, %v1201
        %1219 = vmatpush.bf16.msra.mxu0 %v1210
        %1220 = vmatpush.bf16.msra.mxu0 %v1209
        %1221 = vmatpush.bf16.msra.mxu0 %v1208
        %1222 = vmatpush.bf16.msra.mxu0 %v1207
        %1223 = vmatpush.bf16.msra.mxu0 %v1206
        %1224 = vmatpush.bf16.msra.mxu0 %v1205
        %1225 = vmatpush.bf16.msra.mxu0 %v1204
        %1226 = vmatpush.bf16.msra.mxu0 %v1203
        %1227 = vmatmul.bf16.gmra.mxu0 %v967
        %v1228 = vpop.f32.mrf.mxu0
        %v1229 = vadd.f32 %v1043, %v1228
        %v1230 = vpop.f32.mrf.mxu0
        %1231 = vdwg.mxu0
        %v1248 = vunpack.c.l.b16 %v1017
        %v1249 = vunpack.c.l.b16 %v1018
        %v1250 = vunpack.c.l.b16 %v1019
        %v1251 = vunpack.c.l.b16 %v1020
        %v1252 = vunpack.c.l.b16 %v1021
        %v1253 = vunpack.c.l.b16 %v1022
        %v1254 = vunpack.c.l.b16 %v1023
        %v1255 = vunpack.c.l.b16 %v1024
        %v1256 = vunpack.c.l.b16 %v1025
        %v1257 = vunpack.c.l.b16 %v1026
        %v1258 = vunpack.c.l.b16 %v1027
        %v1259 = vunpack.c.l.b16 %v1028
        %v1260 = vunpack.c.l.b16 %v1029
        %v1261 = vunpack.c.l.b16 %v1030
        %v1262 = vunpack.c.l.b16 %v1031
        %v1263 = vunpack.c.l.b16 %v1032
        %v1264 = vpack.c.b16 %v1249, %v1248
        %v1265 = vpack.c.b16 %v1251, %v1250
        %v1266 = vpack.c.b16 %v1253, %v1252
        %v1267 = vpack.c.b16 %v1255, %v1254
        %v1268 = vpack.c.b16 %v1257, %v1256
        %v1269 = vpack.c.b16 %v1259, %v1258
        %v1270 = vpack.c.b16 %v1261, %v1260
        %v1271 = vpack.c.b16 %v1263, %v1262
        %1280 = vmatpush.bf16.msra.mxu0 %v1271
        %1281 = vmatpush.bf16.msra.mxu0 %v1270
        %1282 = vmatpush.bf16.msra.mxu0 %v1269
        %1283 = vmatpush.bf16.msra.mxu0 %v1268
        %1284 = vmatpush.bf16.msra.mxu0 %v1267
        %1285 = vmatpush.bf16.msra.mxu0 %v1266
        %1286 = vmatpush.bf16.msra.mxu0 %v1265
        %1287 = vmatpush.bf16.msra.mxu0 %v1264
        %1288 = vmatmul.bf16.gmra.mxu0 %v967
        %v1289 = vpop.f32.mrf.mxu0
        %v1290 = vadd.f32 %v1044, %v1289
        %v1291 = vpop.f32.mrf.mxu0
        %1292 = vdwg.mxu0
        %v1293 = vld [vmem:[%s871] sm:$0xf]
        %v1294 = vld [vmem:[%s871 + $0x4] sm:$0xf]
        %v1295 = vld [vmem:[%s871 + $0x8] sm:$0xf]
        %v1296 = vld [vmem:[%s871 + $0xc] sm:$0xf]
        %v1297 = vld [vmem:[%s871 + $0x10] sm:$0xf]
        %v1298 = vld [vmem:[%s871 + $0x14] sm:$0xf]
        %v1299 = vld [vmem:[%s871 + $0x18] sm:$0xf]
        %v1300 = vld [vmem:[%s871 + $0x1c] sm:$0xf]
        %v1301 = vld [vmem:[%s871 + $0x20] sm:$0xf]
        %v1302 = vld [vmem:[%s871 + $0x24] sm:$0xf]
        %v1303 = vld [vmem:[%s871 + $0x28] sm:$0xf]
        %v1304 = vld [vmem:[%s871 + $0x2c] sm:$0xf]
        %v1305 = vld [vmem:[%s871 + $0x30] sm:$0xf]
        %v1306 = vld [vmem:[%s871 + $0x34] sm:$0xf]
        %v1307 = vld [vmem:[%s871 + $0x38] sm:$0xf]
        %v1308 = vld [vmem:[%s871 + $0x3c] sm:$0xf]
        %v1309 = vld [vmem:[%s871 + $0x40] sm:$0xf]
        %v1310 = vld [vmem:[%s871 + $0x44] sm:$0xf]
        %v1311 = vld [vmem:[%s871 + $0x48] sm:$0xf]
        %v1312 = vld [vmem:[%s871 + $0x4c] sm:$0xf]
        %v1313 = vld [vmem:[%s871 + $0x50] sm:$0xf]
        %v1314 = vld [vmem:[%s871 + $0x54] sm:$0xf]
        %v1315 = vld [vmem:[%s871 + $0x58] sm:$0xf]
        %v1316 = vld [vmem:[%s871 + $0x5c] sm:$0xf]
        %v1317 = vld [vmem:[%s871 + $0x60] sm:$0xf]
        %v1318 = vld [vmem:[%s871 + $0x64] sm:$0xf]
        %v1319 = vld [vmem:[%s871 + $0x68] sm:$0xf]
        %v1320 = vld [vmem:[%s871 + $0x6c] sm:$0xf]
        %v1321 = vld [vmem:[%s871 + $0x70] sm:$0xf]
        %v1322 = vld [vmem:[%s871 + $0x74] sm:$0xf]
        %v1323 = vld [vmem:[%s871 + $0x78] sm:$0xf]
        %v1324 = vld [vmem:[%s871 + $0x7c] sm:$0xf]
        %v1325 = vld [vmem:[%s871 + $0x80] sm:$0xf]
        %v1326 = vld [vmem:[%s871 + $0x84] sm:$0xf]
        %v1327 = vld [vmem:[%s871 + $0x88] sm:$0xf]
        %v1328 = vld [vmem:[%s871 + $0x8c] sm:$0xf]
        %v1329 = vld [vmem:[%s871 + $0x90] sm:$0xf]
        %v1330 = vld [vmem:[%s871 + $0x94] sm:$0xf]
        %v1331 = vld [vmem:[%s871 + $0x98] sm:$0xf]
        %v1332 = vld [vmem:[%s871 + $0x9c] sm:$0xf]
        %v1333 = vld [vmem:[%s871 + $0xa0] sm:$0xf]
        %v1334 = vld [vmem:[%s871 + $0xa4] sm:$0xf]
        %v1335 = vld [vmem:[%s871 + $0xa8] sm:$0xf]
        %v1336 = vld [vmem:[%s871 + $0xac] sm:$0xf]
        %v1337 = vld [vmem:[%s871 + $0xb0] sm:$0xf]
        %v1338 = vld [vmem:[%s871 + $0xb4] sm:$0xf]
        %v1339 = vld [vmem:[%s871 + $0xb8] sm:$0xf]
        %v1340 = vld [vmem:[%s871 + $0xbc] sm:$0xf]
        %v1341 = vld [vmem:[%s871 + $0xc0] sm:$0xf]
        %v1342 = vld [vmem:[%s871 + $0xc4] sm:$0xf]
        %v1343 = vld [vmem:[%s871 + $0xc8] sm:$0xf]
        %v1344 = vld [vmem:[%s871 + $0xcc] sm:$0xf]
        %v1345 = vld [vmem:[%s871 + $0xd0] sm:$0xf]
        %v1346 = vld [vmem:[%s871 + $0xd4] sm:$0xf]
        %v1347 = vld [vmem:[%s871 + $0xd8] sm:$0xf]
        %v1348 = vld [vmem:[%s871 + $0xdc] sm:$0xf]
        %v1349 = vld [vmem:[%s871 + $0xe0] sm:$0xf]
        %v1350 = vld [vmem:[%s871 + $0xe4] sm:$0xf]
        %v1351 = vld [vmem:[%s871 + $0xe8] sm:$0xf]
        %v1352 = vld [vmem:[%s871 + $0xec] sm:$0xf]
        %v1353 = vld [vmem:[%s871 + $0xf0] sm:$0xf]
        %v1354 = vld [vmem:[%s871 + $0xf4] sm:$0xf]
        %v1355 = vld [vmem:[%s871 + $0xf8] sm:$0xf]
        %v1356 = vld [vmem:[%s871 + $0xfc] sm:$0xf]
        %v1357 = vld [vmem:[%s875] sm:$0x1]
        %v1358 = vld [vmem:[%s875 + $0x1] sm:$0x1]
        %v1359 = vld [vmem:[%s875 + $0x2] sm:$0x1]
        %v1360 = vld [vmem:[%s875 + $0x3] sm:$0x1]
        %v1365 = vperm.slane %v1357, 0
        %v1366 = vperm.slane %v1358, 0
        %v1367 = vperm.slane %v1359, 0
        %v1368 = vperm.slane %v1360, 0
        %v1389 = vunpack.c.l.b16 %v1293
        %v1390 = vunpack.c.l.b16 %v1294
        %v1391 = vunpack.c.l.b16 %v1295
        %v1392 = vunpack.c.l.b16 %v1296
        %v1393 = vunpack.c.l.b16 %v1297
        %v1394 = vunpack.c.l.b16 %v1298
        %v1395 = vunpack.c.l.b16 %v1299
        %v1396 = vunpack.c.l.b16 %v1300
        %v1397 = vunpack.c.l.b16 %v1301
        %v1398 = vunpack.c.l.b16 %v1302
        %v1399 = vunpack.c.l.b16 %v1303
        %v1400 = vunpack.c.l.b16 %v1304
        %v1401 = vunpack.c.l.b16 %v1305
        %v1402 = vunpack.c.l.b16 %v1306
        %v1403 = vunpack.c.l.b16 %v1307
        %v1404 = vunpack.c.l.b16 %v1308
        %v1405 = vpack.c.b16 %v1390, %v1389
        %v1406 = vpack.c.b16 %v1392, %v1391
        %v1407 = vpack.c.b16 %v1394, %v1393
        %v1408 = vpack.c.b16 %v1396, %v1395
        %v1409 = vpack.c.b16 %v1398, %v1397
        %v1410 = vpack.c.b16 %v1400, %v1399
        %v1411 = vpack.c.b16 %v1402, %v1401
        %v1412 = vpack.c.b16 %v1404, %v1403
        %1421 = vmatpush.bf16.msra.mxu0 %v1412
        %1422 = vmatpush.bf16.msra.mxu0 %v1411
        %1423 = vmatpush.bf16.msra.mxu0 %v1410
        %1424 = vmatpush.bf16.msra.mxu0 %v1409
        %1425 = vmatpush.bf16.msra.mxu0 %v1408
        %1426 = vmatpush.bf16.msra.mxu0 %v1407
        %1427 = vmatpush.bf16.msra.mxu0 %v1406
        %1428 = vmatpush.bf16.msra.mxu0 %v1405
        %1429 = vmatmul.bf16.gmra.mxu0 %v967
        %v1430 = vpop.f32.mrf.mxu0
        %v1431 = vadd.f32 %v1365, %v1430
        %v1432 = vpop.f32.mrf.mxu0
        %1433 = vdwg.mxu0
        %v1450 = vunpack.c.l.b16 %v1309
        %v1451 = vunpack.c.l.b16 %v1310
        %v1452 = vunpack.c.l.b16 %v1311
        %v1453 = vunpack.c.l.b16 %v1312
        %v1454 = vunpack.c.l.b16 %v1313
        %v1455 = vunpack.c.l.b16 %v1314
        %v1456 = vunpack.c.l.b16 %v1315
        %v1457 = vunpack.c.l.b16 %v1316
        %v1458 = vunpack.c.l.b16 %v1317
        %v1459 = vunpack.c.l.b16 %v1318
        %v1460 = vunpack.c.l.b16 %v1319
        %v1461 = vunpack.c.l.b16 %v1320
        %v1462 = vunpack.c.l.b16 %v1321
        %v1463 = vunpack.c.l.b16 %v1322
        %v1464 = vunpack.c.l.b16 %v1323
        %v1465 = vunpack.c.l.b16 %v1324
        %v1466 = vpack.c.b16 %v1451, %v1450
        %v1467 = vpack.c.b16 %v1453, %v1452
        %v1468 = vpack.c.b16 %v1455, %v1454
        %v1469 = vpack.c.b16 %v1457, %v1456
        %v1470 = vpack.c.b16 %v1459, %v1458
        %v1471 = vpack.c.b16 %v1461, %v1460
        %v1472 = vpack.c.b16 %v1463, %v1462
        %v1473 = vpack.c.b16 %v1465, %v1464
        %1482 = vmatpush.bf16.msra.mxu0 %v1473
        %1483 = vmatpush.bf16.msra.mxu0 %v1472
        %1484 = vmatpush.bf16.msra.mxu0 %v1471
        %1485 = vmatpush.bf16.msra.mxu0 %v1470
        %1486 = vmatpush.bf16.msra.mxu0 %v1469
        %1487 = vmatpush.bf16.msra.mxu0 %v1468
        %1488 = vmatpush.bf16.msra.mxu0 %v1467
        %1489 = vmatpush.bf16.msra.mxu0 %v1466
        %1490 = vmatmul.bf16.gmra.mxu0 %v967
        %v1491 = vpop.f32.mrf.mxu0
        %v1492 = vadd.f32 %v1366, %v1491
        %v1493 = vpop.f32.mrf.mxu0
        %1494 = vdwg.mxu0
        %v1511 = vunpack.c.l.b16 %v1325
        %v1512 = vunpack.c.l.b16 %v1326
        %v1513 = vunpack.c.l.b16 %v1327
        %v1514 = vunpack.c.l.b16 %v1328
        %v1515 = vunpack.c.l.b16 %v1329
        %v1516 = vunpack.c.l.b16 %v1330
        %v1517 = vunpack.c.l.b16 %v1331
        %v1518 = vunpack.c.l.b16 %v1332
        %v1519 = vunpack.c.l.b16 %v1333
        %v1520 = vunpack.c.l.b16 %v1334
        %v1521 = vunpack.c.l.b16 %v1335
        %v1522 = vunpack.c.l.b16 %v1336
        %v1523 = vunpack.c.l.b16 %v1337
        %v1524 = vunpack.c.l.b16 %v1338
        %v1525 = vunpack.c.l.b16 %v1339
        %v1526 = vunpack.c.l.b16 %v1340
        %v1527 = vpack.c.b16 %v1512, %v1511
        %v1528 = vpack.c.b16 %v1514, %v1513
        %v1529 = vpack.c.b16 %v1516, %v1515
        %v1530 = vpack.c.b16 %v1518, %v1517
        %v1531 = vpack.c.b16 %v1520, %v1519
        %v1532 = vpack.c.b16 %v1522, %v1521
        %v1533 = vpack.c.b16 %v1524, %v1523
        %v1534 = vpack.c.b16 %v1526, %v1525
        %1543 = vmatpush.bf16.msra.mxu0 %v1534
        %1544 = vmatpush.bf16.msra.mxu0 %v1533
        %1545 = vmatpush.bf16.msra.mxu0 %v1532
        %1546 = vmatpush.bf16.msra.mxu0 %v1531
        %1547 = vmatpush.bf16.msra.mxu0 %v1530
        %1548 = vmatpush.bf16.msra.mxu0 %v1529
        %1549 = vmatpush.bf16.msra.mxu0 %v1528
        %1550 = vmatpush.bf16.msra.mxu0 %v1527
        %1551 = vmatmul.bf16.gmra.mxu0 %v967
        %v1552 = vpop.f32.mrf.mxu0
        %v1553 = vadd.f32 %v1367, %v1552
        %v1554 = vpop.f32.mrf.mxu0
        %1555 = vdwg.mxu0
        %v1572 = vunpack.c.l.b16 %v1341
        %v1573 = vunpack.c.l.b16 %v1342
        %v1574 = vunpack.c.l.b16 %v1343
        %v1575 = vunpack.c.l.b16 %v1344
        %v1576 = vunpack.c.l.b16 %v1345
        %v1577 = vunpack.c.l.b16 %v1346
        %v1578 = vunpack.c.l.b16 %v1347
        %v1579 = vunpack.c.l.b16 %v1348
        %v1580 = vunpack.c.l.b16 %v1349
        %v1581 = vunpack.c.l.b16 %v1350
        %v1582 = vunpack.c.l.b16 %v1351
        %v1583 = vunpack.c.l.b16 %v1352
        %v1584 = vunpack.c.l.b16 %v1353
        %v1585 = vunpack.c.l.b16 %v1354
        %v1586 = vunpack.c.l.b16 %v1355
        %v1587 = vunpack.c.l.b16 %v1356
        %v1588 = vpack.c.b16 %v1573, %v1572
        %v1589 = vpack.c.b16 %v1575, %v1574
        %v1590 = vpack.c.b16 %v1577, %v1576
        %v1591 = vpack.c.b16 %v1579, %v1578
        %v1592 = vpack.c.b16 %v1581, %v1580
        %v1593 = vpack.c.b16 %v1583, %v1582
        %v1594 = vpack.c.b16 %v1585, %v1584
        %v1595 = vpack.c.b16 %v1587, %v1586
        %1604 = vmatpush.bf16.msra.mxu0 %v1595
        %1605 = vmatpush.bf16.msra.mxu0 %v1594
        %1606 = vmatpush.bf16.msra.mxu0 %v1593
        %1607 = vmatpush.bf16.msra.mxu0 %v1592
        %1608 = vmatpush.bf16.msra.mxu0 %v1591
        %1609 = vmatpush.bf16.msra.mxu0 %v1590
        %1610 = vmatpush.bf16.msra.mxu0 %v1589
        %1611 = vmatpush.bf16.msra.mxu0 %v1588
        %1612 = vmatmul.bf16.gmra.mxu0 %v967
        %v1613 = vpop.f32.mrf.mxu0
        %v1614 = vadd.f32 %v1368, %v1613
        %v1615 = vpop.f32.mrf.mxu0
        %1616 = vdwg.mxu0
        %v1617 = vld [vmem:[%s880] sm:$0xf]
        %v1618 = vld [vmem:[%s880 + $0x4] sm:$0xf]
        %v1619 = vld [vmem:[%s880 + $0x8] sm:$0xf]
        %v1620 = vld [vmem:[%s880 + $0xc] sm:$0xf]
        %v1621 = vld [vmem:[%s880 + $0x10] sm:$0xf]
        %v1622 = vld [vmem:[%s880 + $0x14] sm:$0xf]
        %v1623 = vld [vmem:[%s880 + $0x18] sm:$0xf]
        %v1624 = vld [vmem:[%s880 + $0x1c] sm:$0xf]
        %v1625 = vld [vmem:[%s880 + $0x20] sm:$0xf]
        %v1626 = vld [vmem:[%s880 + $0x24] sm:$0xf]
        %v1627 = vld [vmem:[%s880 + $0x28] sm:$0xf]
        %v1628 = vld [vmem:[%s880 + $0x2c] sm:$0xf]
        %v1629 = vld [vmem:[%s880 + $0x30] sm:$0xf]
        %v1630 = vld [vmem:[%s880 + $0x34] sm:$0xf]
        %v1631 = vld [vmem:[%s880 + $0x38] sm:$0xf]
        %v1632 = vld [vmem:[%s880 + $0x3c] sm:$0xf]
        %v1633 = vld [vmem:[%s880 + $0x40] sm:$0xf]
        %v1634 = vld [vmem:[%s880 + $0x44] sm:$0xf]
        %v1635 = vld [vmem:[%s880 + $0x48] sm:$0xf]
        %v1636 = vld [vmem:[%s880 + $0x4c] sm:$0xf]
        %v1637 = vld [vmem:[%s880 + $0x50] sm:$0xf]
        %v1638 = vld [vmem:[%s880 + $0x54] sm:$0xf]
        %v1639 = vld [vmem:[%s880 + $0x58] sm:$0xf]
        %v1640 = vld [vmem:[%s880 + $0x5c] sm:$0xf]
        %v1641 = vld [vmem:[%s880 + $0x60] sm:$0xf]
        %v1642 = vld [vmem:[%s880 + $0x64] sm:$0xf]
        %v1643 = vld [vmem:[%s880 + $0x68] sm:$0xf]
        %v1644 = vld [vmem:[%s880 + $0x6c] sm:$0xf]
        %v1645 = vld [vmem:[%s880 + $0x70] sm:$0xf]
        %v1646 = vld [vmem:[%s880 + $0x74] sm:$0xf]
        %v1647 = vld [vmem:[%s880 + $0x78] sm:$0xf]
        %v1648 = vld [vmem:[%s880 + $0x7c] sm:$0xf]
        %v1649 = vld [vmem:[%s880 + $0x80] sm:$0xf]
        %v1650 = vld [vmem:[%s880 + $0x84] sm:$0xf]
        %v1651 = vld [vmem:[%s880 + $0x88] sm:$0xf]
        %v1652 = vld [vmem:[%s880 + $0x8c] sm:$0xf]
        %v1653 = vld [vmem:[%s880 + $0x90] sm:$0xf]
        %v1654 = vld [vmem:[%s880 + $0x94] sm:$0xf]
        %v1655 = vld [vmem:[%s880 + $0x98] sm:$0xf]
        %v1656 = vld [vmem:[%s880 + $0x9c] sm:$0xf]
        %v1657 = vld [vmem:[%s880 + $0xa0] sm:$0xf]
        %v1658 = vld [vmem:[%s880 + $0xa4] sm:$0xf]
        %v1659 = vld [vmem:[%s880 + $0xa8] sm:$0xf]
        %v1660 = vld [vmem:[%s880 + $0xac] sm:$0xf]
        %v1661 = vld [vmem:[%s880 + $0xb0] sm:$0xf]
        %v1662 = vld [vmem:[%s880 + $0xb4] sm:$0xf]
        %v1663 = vld [vmem:[%s880 + $0xb8] sm:$0xf]
        %v1664 = vld [vmem:[%s880 + $0xbc] sm:$0xf]
        %v1665 = vld [vmem:[%s880 + $0xc0] sm:$0xf]
        %v1666 = vld [vmem:[%s880 + $0xc4] sm:$0xf]
        %v1667 = vld [vmem:[%s880 + $0xc8] sm:$0xf]
        %v1668 = vld [vmem:[%s880 + $0xcc] sm:$0xf]
        %v1669 = vld [vmem:[%s880 + $0xd0] sm:$0xf]
        %v1670 = vld [vmem:[%s880 + $0xd4] sm:$0xf]
        %v1671 = vld [vmem:[%s880 + $0xd8] sm:$0xf]
        %v1672 = vld [vmem:[%s880 + $0xdc] sm:$0xf]
        %v1673 = vld [vmem:[%s880 + $0xe0] sm:$0xf]
        %v1674 = vld [vmem:[%s880 + $0xe4] sm:$0xf]
        %v1675 = vld [vmem:[%s880 + $0xe8] sm:$0xf]
        %v1676 = vld [vmem:[%s880 + $0xec] sm:$0xf]
        %v1677 = vld [vmem:[%s880 + $0xf0] sm:$0xf]
        %v1678 = vld [vmem:[%s880 + $0xf4] sm:$0xf]
        %v1679 = vld [vmem:[%s880 + $0xf8] sm:$0xf]
        %v1680 = vld [vmem:[%s880 + $0xfc] sm:$0xf]
        %v1681 = vld [vmem:[%s884] sm:$0x1]
        %v1682 = vld [vmem:[%s884 + $0x1] sm:$0x1]
        %v1683 = vld [vmem:[%s884 + $0x2] sm:$0x1]
        %v1684 = vld [vmem:[%s884 + $0x3] sm:$0x1]
        %v1689 = vperm.slane %v1681, 0
        %v1690 = vperm.slane %v1682, 0
        %v1691 = vperm.slane %v1683, 0
        %v1692 = vperm.slane %v1684, 0
        %v1713 = vunpack.c.l.b16 %v1617
        %v1714 = vunpack.c.l.b16 %v1618
        %v1715 = vunpack.c.l.b16 %v1619
        %v1716 = vunpack.c.l.b16 %v1620
        %v1717 = vunpack.c.l.b16 %v1621
        %v1718 = vunpack.c.l.b16 %v1622
        %v1719 = vunpack.c.l.b16 %v1623
        %v1720 = vunpack.c.l.b16 %v1624
        %v1721 = vunpack.c.l.b16 %v1625
        %v1722 = vunpack.c.l.b16 %v1626
        %v1723 = vunpack.c.l.b16 %v1627
        %v1724 = vunpack.c.l.b16 %v1628
        %v1725 = vunpack.c.l.b16 %v1629
        %v1726 = vunpack.c.l.b16 %v1630
        %v1727 = vunpack.c.l.b16 %v1631
        %v1728 = vunpack.c.l.b16 %v1632
        %v1729 = vpack.c.b16 %v1714, %v1713
        %v1730 = vpack.c.b16 %v1716, %v1715
        %v1731 = vpack.c.b16 %v1718, %v1717
        %v1732 = vpack.c.b16 %v1720, %v1719
        %v1733 = vpack.c.b16 %v1722, %v1721
        %v1734 = vpack.c.b16 %v1724, %v1723
        %v1735 = vpack.c.b16 %v1726, %v1725
        %v1736 = vpack.c.b16 %v1728, %v1727
        %1745 = vmatpush.bf16.msra.mxu0 %v1736
        %1746 = vmatpush.bf16.msra.mxu0 %v1735
        %1747 = vmatpush.bf16.msra.mxu0 %v1734
        %1748 = vmatpush.bf16.msra.mxu0 %v1733
        %1749 = vmatpush.bf16.msra.mxu0 %v1732
        %1750 = vmatpush.bf16.msra.mxu0 %v1731
        %1751 = vmatpush.bf16.msra.mxu0 %v1730
        %1752 = vmatpush.bf16.msra.mxu0 %v1729
        %1753 = vmatmul.bf16.gmra.mxu0 %v967
        %v1754 = vpop.f32.mrf.mxu0
        %v1755 = vadd.f32 %v1689, %v1754
        %v1756 = vpop.f32.mrf.mxu0
        %1757 = vdwg.mxu0
        %v1774 = vunpack.c.l.b16 %v1633
        %v1775 = vunpack.c.l.b16 %v1634
        %v1776 = vunpack.c.l.b16 %v1635
        %v1777 = vunpack.c.l.b16 %v1636
        %v1778 = vunpack.c.l.b16 %v1637
        %v1779 = vunpack.c.l.b16 %v1638
        %v1780 = vunpack.c.l.b16 %v1639
        %v1781 = vunpack.c.l.b16 %v1640
        %v1782 = vunpack.c.l.b16 %v1641
        %v1783 = vunpack.c.l.b16 %v1642
        %v1784 = vunpack.c.l.b16 %v1643
        %v1785 = vunpack.c.l.b16 %v1644
        %v1786 = vunpack.c.l.b16 %v1645
        %v1787 = vunpack.c.l.b16 %v1646
        %v1788 = vunpack.c.l.b16 %v1647
        %v1789 = vunpack.c.l.b16 %v1648
        %v1790 = vpack.c.b16 %v1775, %v1774
        %v1791 = vpack.c.b16 %v1777, %v1776
        %v1792 = vpack.c.b16 %v1779, %v1778
        %v1793 = vpack.c.b16 %v1781, %v1780
        %v1794 = vpack.c.b16 %v1783, %v1782
        %v1795 = vpack.c.b16 %v1785, %v1784
        %v1796 = vpack.c.b16 %v1787, %v1786
        %v1797 = vpack.c.b16 %v1789, %v1788
        %1806 = vmatpush.bf16.msra.mxu0 %v1797
        %1807 = vmatpush.bf16.msra.mxu0 %v1796
        %1808 = vmatpush.bf16.msra.mxu0 %v1795
        %1809 = vmatpush.bf16.msra.mxu0 %v1794
        %1810 = vmatpush.bf16.msra.mxu0 %v1793
        %1811 = vmatpush.bf16.msra.mxu0 %v1792
        %1812 = vmatpush.bf16.msra.mxu0 %v1791
        %1813 = vmatpush.bf16.msra.mxu0 %v1790
        %1814 = vmatmul.bf16.gmra.mxu0 %v967
        %v1815 = vpop.f32.mrf.mxu0
        %v1816 = vadd.f32 %v1690, %v1815
        %v1817 = vpop.f32.mrf.mxu0
        %1818 = vdwg.mxu0
        %v1835 = vunpack.c.l.b16 %v1649
        %v1836 = vunpack.c.l.b16 %v1650
        %v1837 = vunpack.c.l.b16 %v1651
        %v1838 = vunpack.c.l.b16 %v1652
        %v1839 = vunpack.c.l.b16 %v1653
        %v1840 = vunpack.c.l.b16 %v1654
        %v1841 = vunpack.c.l.b16 %v1655
        %v1842 = vunpack.c.l.b16 %v1656
        %v1843 = vunpack.c.l.b16 %v1657
        %v1844 = vunpack.c.l.b16 %v1658
        %v1845 = vunpack.c.l.b16 %v1659
        %v1846 = vunpack.c.l.b16 %v1660
        %v1847 = vunpack.c.l.b16 %v1661
        %v1848 = vunpack.c.l.b16 %v1662
        %v1849 = vunpack.c.l.b16 %v1663
        %v1850 = vunpack.c.l.b16 %v1664
        %v1851 = vpack.c.b16 %v1836, %v1835
        %v1852 = vpack.c.b16 %v1838, %v1837
        %v1853 = vpack.c.b16 %v1840, %v1839
        %v1854 = vpack.c.b16 %v1842, %v1841
        %v1855 = vpack.c.b16 %v1844, %v1843
        %v1856 = vpack.c.b16 %v1846, %v1845
        %v1857 = vpack.c.b16 %v1848, %v1847
        %v1858 = vpack.c.b16 %v1850, %v1849
        %1867 = vmatpush.bf16.msra.mxu0 %v1858
        %1868 = vmatpush.bf16.msra.mxu0 %v1857
        %1869 = vmatpush.bf16.msra.mxu0 %v1856
        %1870 = vmatpush.bf16.msra.mxu0 %v1855
        %1871 = vmatpush.bf16.msra.mxu0 %v1854
        %1872 = vmatpush.bf16.msra.mxu0 %v1853
        %1873 = vmatpush.bf16.msra.mxu0 %v1852
        %1874 = vmatpush.bf16.msra.mxu0 %v1851
        %1875 = vmatmul.bf16.gmra.mxu0 %v967
        %v1876 = vpop.f32.mrf.mxu0
        %v1877 = vadd.f32 %v1691, %v1876
        %v1878 = vpop.f32.mrf.mxu0
        %1879 = vdwg.mxu0
        %v1896 = vunpack.c.l.b16 %v1665
        %v1897 = vunpack.c.l.b16 %v1666
        %v1898 = vunpack.c.l.b16 %v1667
        %v1899 = vunpack.c.l.b16 %v1668
        %v1900 = vunpack.c.l.b16 %v1669
        %v1901 = vunpack.c.l.b16 %v1670
        %v1902 = vunpack.c.l.b16 %v1671
        %v1903 = vunpack.c.l.b16 %v1672
        %v1904 = vunpack.c.l.b16 %v1673
        %v1905 = vunpack.c.l.b16 %v1674
        %v1906 = vunpack.c.l.b16 %v1675
        %v1907 = vunpack.c.l.b16 %v1676
        %v1908 = vunpack.c.l.b16 %v1677
        %v1909 = vunpack.c.l.b16 %v1678
        %v1910 = vunpack.c.l.b16 %v1679
        %v1911 = vunpack.c.l.b16 %v1680
        %v1912 = vpack.c.b16 %v1897, %v1896
        %v1913 = vpack.c.b16 %v1899, %v1898
        %v1914 = vpack.c.b16 %v1901, %v1900
        %v1915 = vpack.c.b16 %v1903, %v1902
        %v1916 = vpack.c.b16 %v1905, %v1904
        %v1917 = vpack.c.b16 %v1907, %v1906
        %v1918 = vpack.c.b16 %v1909, %v1908
        %v1919 = vpack.c.b16 %v1911, %v1910
        %1928 = vmatpush.bf16.msra.mxu0 %v1919
        %1929 = vmatpush.bf16.msra.mxu0 %v1918
        %1930 = vmatpush.bf16.msra.mxu0 %v1917
        %1931 = vmatpush.bf16.msra.mxu0 %v1916
        %1932 = vmatpush.bf16.msra.mxu0 %v1915
        %1933 = vmatpush.bf16.msra.mxu0 %v1914
        %1934 = vmatpush.bf16.msra.mxu0 %v1913
        %1935 = vmatpush.bf16.msra.mxu0 %v1912
        %1936 = vmatmul.bf16.gmra.mxu0 %v967
        %v1937 = vpop.f32.mrf.mxu0
        %v1938 = vadd.f32 %v1692, %v1937
        %v1939 = vpop.f32.mrf.mxu0
        %1940 = vdwg.mxu0
        %v1941 = vpack.c.bf16 %v1107, %v1107
        %v1942 = vpack.c.bf16 %v1168, %v1168
        %v1943 = vpack.c.bf16 %v1229, %v1229
        %v1944 = vpack.c.bf16 %v1290, %v1290
        %v1945 = vpack.c.bf16 %v1431, %v1431
        %v1946 = vpack.c.bf16 %v1492, %v1492
        %v1947 = vpack.c.bf16 %v1553, %v1553
        %v1948 = vpack.c.bf16 %v1614, %v1614
        %v1950 = vperm.slane %v968, 0
        %vm1952 = vcmask 261120
        %v1954 = vsel %vm1952, %v1941, 0
        %v1957 = vsel %vm1952, %v1945, 0
        %1959 = vmatpush.bf16.xpose.msra.mxu0 0
        %1960 = vmatpush.bf16.xpose.msra.mxu0 0
        %1961 = vmatpush.bf16.xpose.msra.mxu0 0
        %1962 = vmatpush.bf16.xpose.msra.mxu0 0
        %1963 = vmatpush.bf16.xpose.msra.mxu0 0
        %1964 = vmatpush.bf16.xpose.msra.mxu0 0
        %1965 = vmatpush.bf16.xpose.msra.mxu0 0
        %1966 = vmatpush.bf16.xpose.msra.mxu0 %v1957
        %1967 = vmatmul.bf16.gmra.mxu0 %v1954
        %v1968 = vpop.f32.mrf.mxu0
        %v1969 = vadd.f32 %v1950, %v1968
        %v1970 = vpop.f32.mrf.mxu0
        %1971 = vdwg.mxu0
        %v1973 = vsel %vm1952, %v1942, 0
        %v1976 = vsel %vm1952, %v1946, 0
        %1978 = vmatpush.bf16.xpose.msra.mxu0 0
        %1979 = vmatpush.bf16.xpose.msra.mxu0 0
        %1980 = vmatpush.bf16.xpose.msra.mxu0 0
        %1981 = vmatpush.bf16.xpose.msra.mxu0 0
        %1982 = vmatpush.bf16.xpose.msra.mxu0 0
        %1983 = vmatpush.bf16.xpose.msra.mxu0 0
        %1984 = vmatpush.bf16.xpose.msra.mxu0 0
        %1985 = vmatpush.bf16.xpose.msra.mxu0 %v1976
        %1986 = vmatmul.bf16.gmra.mxu0 %v1973
        %v1987 = vpop.f32.mrf.mxu0
        %v1988 = vadd.f32 %v1950, %v1987
        %v1989 = vpop.f32.mrf.mxu0
        %1990 = vdwg.mxu0
        %v1992 = vsel %vm1952, %v1943, 0
        %v1995 = vsel %vm1952, %v1947, 0
        %1997 = vmatpush.bf16.xpose.msra.mxu0 0
        %1998 = vmatpush.bf16.xpose.msra.mxu0 0
        %1999 = vmatpush.bf16.xpose.msra.mxu0 0
        %2000 = vmatpush.bf16.xpose.msra.mxu0 0
        %2001 = vmatpush.bf16.xpose.msra.mxu0 0
        %2002 = vmatpush.bf16.xpose.msra.mxu0 0
        %2003 = vmatpush.bf16.xpose.msra.mxu0 0
        %2004 = vmatpush.bf16.xpose.msra.mxu0 %v1995
        %2005 = vmatmul.bf16.gmra.mxu0 %v1992
        %v2006 = vpop.f32.mrf.mxu0
        %v2007 = vadd.f32 %v1950, %v2006
        %v2008 = vpop.f32.mrf.mxu0
        %2009 = vdwg.mxu0
        %v2011 = vsel %vm1952, %v1944, 0
        %v2014 = vsel %vm1952, %v1948, 0
        %2016 = vmatpush.bf16.xpose.msra.mxu0 0
        %2017 = vmatpush.bf16.xpose.msra.mxu0 0
        %2018 = vmatpush.bf16.xpose.msra.mxu0 0
        %2019 = vmatpush.bf16.xpose.msra.mxu0 0
        %2020 = vmatpush.bf16.xpose.msra.mxu0 0
        %2021 = vmatpush.bf16.xpose.msra.mxu0 0
        %2022 = vmatpush.bf16.xpose.msra.mxu0 0
        %2023 = vmatpush.bf16.xpose.msra.mxu0 %v2014
        %2024 = vmatmul.bf16.gmra.mxu0 %v2011
        %v2025 = vpop.f32.mrf.mxu0
        %v2026 = vadd.f32 %v1950, %v2025
        %v2027 = vpop.f32.mrf.mxu0
        %2028 = vdwg.mxu0
        %vm2029 = vcmask 64512
        %v2030 = vsel %vm2029, %v1969, -inf
        %2031 = vmax.xlane.f32.xlu0 %v2030
        %v2032 = vpop.xlane.xlu0 %2031
        %v2033 = vsel %vm2029, %v1988, -inf
        %2034 = vmax.xlane.f32.xlu0 %v2033
        %v2035 = vpop.xlane.xlu0 %2034
        %v2036 = vsel %vm2029, %v2007, -inf
        %2037 = vmax.xlane.f32.xlu0 %v2036
        %v2038 = vpop.xlane.xlu0 %2037
        %v2039 = vsel %vm2029, %v2026, -inf
        %2040 = vmax.xlane.f32.xlu0 %v2039
        %v2041 = vpop.xlane.xlu0 %2040
        %v2042 = vsub.f32 %v1969, %v2032
        %v2043 = vsub.f32 %v1988, %v2035
        %v2044 = vsub.f32 %v2007, %v2038
        %v2045 = vsub.f32 %v2026, %v2041
        %v2046 = vmul.f32 %v2042, 1.442695
        %v2047 = vpow.pop %v2046
        %v2048 = vmul.f32 %v2043, 1.442695
        %v2049 = vpow.pop %v2048
        %v2050 = vmul.f32 %v2044, 1.442695
        %v2051 = vpow.pop %v2050
        %v2052 = vmul.f32 %v2045, 1.442695
        %v2053 = vpow.pop %v2052
        %v2054 = vsel %vm2029, %v2047, 0.0
        %2055 = vadd.xlane.f32.xlu0 %v2054
        %v2056 = vpop.xlane.xlu0 %2055
        %v2057 = vsel %vm2029, %v2049, 0.0
        %2058 = vadd.xlane.f32.xlu0 %v2057
        %v2059 = vpop.xlane.xlu0 %2058
        %v2060 = vsel %vm2029, %v2051, 0.0
        %2061 = vadd.xlane.f32.xlu0 %v2060
        %v2062 = vpop.xlane.xlu0 %2061
        %v2063 = vsel %vm2029, %v2053, 0.0
        %2064 = vadd.xlane.f32.xlu0 %v2063
        %v2065 = vpop.xlane.xlu0 %2064
        %v2066 = vrcp.pop %v2056
        %v2067 = vrcp.pop %v2059
        %v2068 = vrcp.pop %v2062
        %v2069 = vrcp.pop %v2065
        %v2070 = vmul.f32 %v2047, %v2066
        %v2071 = vmul.f32 %v2049, %v2067
        %v2072 = vmul.f32 %v2051, %v2068
        %v2073 = vmul.f32 %v2053, %v2069
        %v2074 = vpack.c.bf16 %v2070, %v2070
        %v2075 = vpack.c.bf16 %v2071, %v2071
        %v2076 = vpack.c.bf16 %v2072, %v2072
        %v2077 = vpack.c.bf16 %v2073, %v2073
        %v2078 = vpack.c.bf16 %v1755, %v1755
        %v2079 = vpack.c.bf16 %v1816, %v1816
        %v2080 = vpack.c.bf16 %v1877, %v1877
        %v2081 = vpack.c.bf16 %v1938, %v1938
        %v2083 = vsel %vm2029, %v2074, 0
        %vm2085 = vcmask 1043456
        %v2087 = vsel %vm2085, %v2078, 0
        %2089 = vmatpush.bf16.msra.mxu0 0
        %2090 = vmatpush.bf16.msra.mxu0 0
        %2091 = vmatpush.bf16.msra.mxu0 0
        %2092 = vmatpush.bf16.msra.mxu0 0
        %2093 = vmatpush.bf16.msra.mxu0 0
        %2094 = vmatpush.bf16.msra.mxu0 0
        %2095 = vmatpush.bf16.msra.mxu0 0
        %2096 = vmatpush.bf16.msra.mxu0 %v2087
        %2097 = vmatmul.bf16.gmra.mxu0 %v2083
        %v2098 = vpop.f32.mrf.mxu0
        %v2099 = vadd.f32 0.0, %v2098
        %v2100 = vpop.f32.mrf.mxu0
        %2101 = vdwg.mxu0
        %v2103 = vsel %vm2029, %v2075, 0
        %v2106 = vsel %vm2085, %v2079, 0
        %2108 = vmatpush.bf16.msra.mxu0 0
        %2109 = vmatpush.bf16.msra.mxu0 0
        %2110 = vmatpush.bf16.msra.mxu0 0
        %2111 = vmatpush.bf16.msra.mxu0 0
        %2112 = vmatpush.bf16.msra.mxu0 0
        %2113 = vmatpush.bf16.msra.mxu0 0
        %2114 = vmatpush.bf16.msra.mxu0 0
        %2115 = vmatpush.bf16.msra.mxu0 %v2106
        %2116 = vmatmul.bf16.gmra.mxu0 %v2103
        %v2117 = vpop.f32.mrf.mxu0
        %v2118 = vadd.f32 0.0, %v2117
        %v2119 = vpop.f32.mrf.mxu0
        %2120 = vdwg.mxu0
        %v2122 = vsel %vm2029, %v2076, 0
        %v2125 = vsel %vm2085, %v2080, 0
        %2127 = vmatpush.bf16.msra.mxu0 0
        %2128 = vmatpush.bf16.msra.mxu0 0
        %2129 = vmatpush.bf16.msra.mxu0 0
        %2130 = vmatpush.bf16.msra.mxu0 0
        %2131 = vmatpush.bf16.msra.mxu0 0
        %2132 = vmatpush.bf16.msra.mxu0 0
        %2133 = vmatpush.bf16.msra.mxu0 0
        %2134 = vmatpush.bf16.msra.mxu0 %v2125
        %2135 = vmatmul.bf16.gmra.mxu0 %v2122
        %v2136 = vpop.f32.mrf.mxu0
        %v2137 = vadd.f32 0.0, %v2136
        %v2138 = vpop.f32.mrf.mxu0
        %2139 = vdwg.mxu0
        %v2141 = vsel %vm2029, %v2077, 0
        %v2144 = vsel %vm2085, %v2081, 0
        %2146 = vmatpush.bf16.msra.mxu0 0
        %2147 = vmatpush.bf16.msra.mxu0 0
        %2148 = vmatpush.bf16.msra.mxu0 0
        %2149 = vmatpush.bf16.msra.mxu0 0
        %2150 = vmatpush.bf16.msra.mxu0 0
        %2151 = vmatpush.bf16.msra.mxu0 0
        %2152 = vmatpush.bf16.msra.mxu0 0
        %2153 = vmatpush.bf16.msra.mxu0 %v2144
        %2154 = vmatmul.bf16.gmra.mxu0 %v2141
        %v2155 = vpop.f32.mrf.mxu0
        %v2156 = vadd.f32 0.0, %v2155
        %v2157 = vpop.f32.mrf.mxu0
        %2158 = vdwg.mxu0
        %v2159 = vpack.c.bf16 %v2099, %v2099
        %v2160 = vpack.c.bf16 %v2118, %v2118
        %v2161 = vpack.c.bf16 %v2137, %v2137
        %v2162 = vpack.c.bf16 %v2156, %v2156
        %v2163 = vld [vmem:[%s889] sm:$0xf]
        %v2164 = vld [vmem:[%s889 + $0x4] sm:$0xf]
        %v2165 = vld [vmem:[%s889 + $0x8] sm:$0xf]
        %v2166 = vld [vmem:[%s889 + $0xc] sm:$0xf]
        %v2167 = vld [vmem:[%s889 + $0x10] sm:$0xf]
        %v2168 = vld [vmem:[%s889 + $0x14] sm:$0xf]
        %v2169 = vld [vmem:[%s889 + $0x18] sm:$0xf]
        %v2170 = vld [vmem:[%s889 + $0x1c] sm:$0xf]
        %v2171 = vld [vmem:[%s889 + $0x20] sm:$0xf]
        %v2172 = vld [vmem:[%s889 + $0x24] sm:$0xf]
        %v2173 = vld [vmem:[%s889 + $0x28] sm:$0xf]
        %v2174 = vld [vmem:[%s889 + $0x2c] sm:$0xf]
        %v2175 = vld [vmem:[%s889 + $0x30] sm:$0xf]
        %v2176 = vld [vmem:[%s889 + $0x34] sm:$0xf]
        %v2177 = vld [vmem:[%s889 + $0x38] sm:$0xf]
        %v2178 = vld [vmem:[%s889 + $0x3c] sm:$0xf]
        %v2183 = vunpack.c.l.b16 %v2163
        %v2184 = vunpack.c.l.b16 %v2164
        %v2185 = vunpack.c.l.b16 %v2165
        %v2186 = vunpack.c.l.b16 %v2166
        %v2187 = vpack.c.b16 %v2184, %v2183
        %v2188 = vpack.c.b16 %v2186, %v2185
        %v2192 = vsel %vm1952, %v2159, 0
        %2194 = vmatpush.bf16.msra.mxu0 0
        %2195 = vmatpush.bf16.msra.mxu0 0
        %2196 = vmatpush.bf16.msra.mxu0 0
        %2197 = vmatpush.bf16.msra.mxu0 0
        %2198 = vmatpush.bf16.msra.mxu0 0
        %2199 = vmatpush.bf16.msra.mxu0 0
        %2200 = vmatpush.bf16.msra.mxu0 %v2188
        %2201 = vmatpush.bf16.msra.mxu0 %v2187
        %2202 = vmatmul.bf16.gmra.mxu0 %v2192
        %v2203 = vpop.f32.mrf.mxu0
        %v2204 = vadd.f32 0.0, %v2203
        %v2205 = vpop.f32.mrf.mxu0
        %2206 = vdwg.mxu0
        %v2211 = vunpack.c.l.b16 %v2167
        %v2212 = vunpack.c.l.b16 %v2168
        %v2213 = vunpack.c.l.b16 %v2169
        %v2214 = vunpack.c.l.b16 %v2170
        %v2215 = vpack.c.b16 %v2212, %v2211
        %v2216 = vpack.c.b16 %v2214, %v2213
        %v2220 = vsel %vm1952, %v2160, 0
        %2222 = vmatpush.bf16.msra.mxu0 0
        %2223 = vmatpush.bf16.msra.mxu0 0
        %2224 = vmatpush.bf16.msra.mxu0 0
        %2225 = vmatpush.bf16.msra.mxu0 0
        %2226 = vmatpush.bf16.msra.mxu0 0
        %2227 = vmatpush.bf16.msra.mxu0 0
        %2228 = vmatpush.bf16.msra.mxu0 %v2216
        %2229 = vmatpush.bf16.msra.mxu0 %v2215
        %2230 = vmatmul.bf16.gmra.mxu0 %v2220
        %v2231 = vpop.f32.mrf.mxu0
        %v2232 = vadd.f32 0.0, %v2231
        %v2233 = vpop.f32.mrf.mxu0
        %2234 = vdwg.mxu0
        %v2239 = vunpack.c.l.b16 %v2171
        %v2240 = vunpack.c.l.b16 %v2172
        %v2241 = vunpack.c.l.b16 %v2173
        %v2242 = vunpack.c.l.b16 %v2174
        %v2243 = vpack.c.b16 %v2240, %v2239
        %v2244 = vpack.c.b16 %v2242, %v2241
        %v2248 = vsel %vm1952, %v2161, 0
        %2250 = vmatpush.bf16.msra.mxu0 0
        %2251 = vmatpush.bf16.msra.mxu0 0
        %2252 = vmatpush.bf16.msra.mxu0 0
        %2253 = vmatpush.bf16.msra.mxu0 0
        %2254 = vmatpush.bf16.msra.mxu0 0
        %2255 = vmatpush.bf16.msra.mxu0 0
        %2256 = vmatpush.bf16.msra.mxu0 %v2244
        %2257 = vmatpush.bf16.msra.mxu0 %v2243
        %2258 = vmatmul.bf16.gmra.mxu0 %v2248
        %v2259 = vpop.f32.mrf.mxu0
        %v2260 = vadd.f32 0.0, %v2259
        %v2261 = vpop.f32.mrf.mxu0
        %2262 = vdwg.mxu0
        %v2267 = vunpack.c.l.b16 %v2175
        %v2268 = vunpack.c.l.b16 %v2176
        %v2269 = vunpack.c.l.b16 %v2177
        %v2270 = vunpack.c.l.b16 %v2178
        %v2271 = vpack.c.b16 %v2268, %v2267
        %v2272 = vpack.c.b16 %v2270, %v2269
        %v2276 = vsel %vm1952, %v2162, 0
        %2278 = vmatpush.bf16.msra.mxu0 0
        %2279 = vmatpush.bf16.msra.mxu0 0
        %2280 = vmatpush.bf16.msra.mxu0 0
        %2281 = vmatpush.bf16.msra.mxu0 0
        %2282 = vmatpush.bf16.msra.mxu0 0
        %2283 = vmatpush.bf16.msra.mxu0 0
        %2284 = vmatpush.bf16.msra.mxu0 %v2272
        %2285 = vmatpush.bf16.msra.mxu0 %v2271
        %2286 = vmatmul.bf16.gmra.mxu0 %v2276
        %v2287 = vpop.f32.mrf.mxu0
        %v2288 = vadd.f32 0.0, %v2287
        %v2289 = vpop.f32.mrf.mxu0
        %2290 = vdwg.mxu0
        %v2291 = vadd.f32 %v2204, %v2232
        %v2292 = vadd.f32 %v2291, %v2260
        %v2293 = vadd.f32 %v2292, %v2288
        %v2294 = vld [vmem:[%s892] sm:$0x1]
        %v2296 = vperm.slane %v2294, 0
        %v2298 = vadd.f32 %v2293, %v2296
        %v2299 = vadd.f32 %v2298, %v966
        %v2300 = vld [vmem:[%s895] sm:$0x1]
        %v2301 = vld [vmem:[%s898] sm:$0x1]
        %2302 = vadd.xlane.f32.xlu0 %v2299
        %v2303 = vpop.xlane.xlu0 %2302
        %v2304 = vrcp.pop 128.0
        %v2305 = vmul.f32 128.0, %v2304
        %v2306 = vsub.f32 1.0, %v2305
        %v2307 = vmul.f32 %v2304, %v2306
        %v2308 = vadd.f32 %v2304, %v2307
        %vm2309 = vweird.f32 %v2304
        %v2310 = vsel %vm2309, %v2304, %v2308
        %v2311 = vmul.f32 %v2303, %v2310
        %v2312 = vsub.f32 %v2299, %v2311
        %v2313 = vmul.f32 %v2312, %v2312
        %2314 = vadd.xlane.f32.xlu0 %v2313
        %v2315 = vpop.xlane.xlu0 %2314
        %v2316 = vmul.f32 %v2315, %v2310
        %v2317 = vadd.f32 %v2316, 1e-12
        %v2318 = vrsqrt.pop %v2317
        %v2319 = vmul.f32 %v2318, %v2317
        %v2320 = vmul.f32 %v2319, %v2318
        %v2321 = vmul.f32 0.5, %v2320
        %v2322 = vsub.f32 1.5, %v2321
        %v2323 = vmul.f32 %v2318, %v2322
        %vm2324 = vweird.f32 %v2317
        %vm2325 = vweird.f32 %v2318
        %vm2326 = vmor %vm2324, %vm2325
        %v2327 = vsel %vm2326, %v2318, %v2323
        %v2328 = vmul.f32 %v2312, %v2327
        %v2330 = vperm.slane %v2300, 0
        %v2332 = vmul.f32 %v2328, %v2330
        %v2334 = vperm.slane %v2301, 0
        %v2336 = vadd.f32 %v2332, %v2334
        %v2337 = vpack.c.bf16 %v2336, %v2336
        %v2338 = vld [vmem:[%s903] sm:$0xff]
        %v2339 = vld [vmem:[%s903 + $0x8] sm:$0xff]
        %v2340 = vld [vmem:[%s903 + $0x10] sm:$0xff]
        %v2341 = vld [vmem:[%s903 + $0x18] sm:$0xff]
        %v2342 = vld [vmem:[%s903 + $0x20] sm:$0xff]
        %v2343 = vld [vmem:[%s903 + $0x28] sm:$0xff]
        %v2344 = vld [vmem:[%s903 + $0x30] sm:$0xff]
        %v2345 = vld [vmem:[%s903 + $0x38] sm:$0xff]
        %v2346 = vld [vmem:[%s903 + $0x40] sm:$0xff]
        %v2347 = vld [vmem:[%s903 + $0x48] sm:$0xff]
        %v2348 = vld [vmem:[%s903 + $0x50] sm:$0xff]
        %v2349 = vld [vmem:[%s903 + $0x58] sm:$0xff]
        %v2350 = vld [vmem:[%s903 + $0x60] sm:$0xff]
        %v2351 = vld [vmem:[%s903 + $0x68] sm:$0xff]
        %v2352 = vld [vmem:[%s903 + $0x70] sm:$0xff]
        %v2353 = vld [vmem:[%s903 + $0x78] sm:$0xff]
        %v2354 = vld [vmem:[%s907] sm:$0x3]
        %v2356 = vperm.slane %v2354, 0
        %v2357 = vperm.slane %v2354, 1
        %v2376 = vunpack.c.l.b16 %v2338
        %v2377 = vunpack.c.h.b16 %v2338
        %v2378 = vunpack.c.l.b16 %v2339
        %v2379 = vunpack.c.h.b16 %v2339
        %v2380 = vunpack.c.l.b16 %v2340
        %v2381 = vunpack.c.h.b16 %v2340
        %v2382 = vunpack.c.l.b16 %v2341
        %v2383 = vunpack.c.h.b16 %v2341
        %v2384 = vunpack.c.l.b16 %v2342
        %v2385 = vunpack.c.h.b16 %v2342
        %v2386 = vunpack.c.l.b16 %v2343
        %v2387 = vunpack.c.h.b16 %v2343
        %v2388 = vunpack.c.l.b16 %v2344
        %v2389 = vunpack.c.h.b16 %v2344
        %v2390 = vunpack.c.l.b16 %v2345
        %v2391 = vunpack.c.h.b16 %v2345
        %v2392 = vunpack.c.l.b16 %v2346
        %v2393 = vunpack.c.h.b16 %v2346
        %v2394 = vunpack.c.l.b16 %v2347
        %v2395 = vunpack.c.h.b16 %v2347
        %v2396 = vunpack.c.l.b16 %v2348
        %v2397 = vunpack.c.h.b16 %v2348
        %v2398 = vunpack.c.l.b16 %v2349
        %v2399 = vunpack.c.h.b16 %v2349
        %v2400 = vunpack.c.l.b16 %v2350
        %v2401 = vunpack.c.h.b16 %v2350
        %v2402 = vunpack.c.l.b16 %v2351
        %v2403 = vunpack.c.h.b16 %v2351
        %v2404 = vunpack.c.l.b16 %v2352
        %v2405 = vunpack.c.h.b16 %v2352
        %v2406 = vunpack.c.l.b16 %v2353
        %v2407 = vunpack.c.h.b16 %v2353
        %v2408 = vpack.c.b16 %v2378, %v2376
        %v2409 = vpack.c.b16 %v2379, %v2377
        %v2410 = vpack.c.b16 %v2382, %v2380
        %v2411 = vpack.c.b16 %v2383, %v2381
        %v2412 = vpack.c.b16 %v2386, %v2384
        %v2413 = vpack.c.b16 %v2387, %v2385
        %v2414 = vpack.c.b16 %v2390, %v2388
        %v2415 = vpack.c.b16 %v2391, %v2389
        %v2416 = vpack.c.b16 %v2394, %v2392
        %v2417 = vpack.c.b16 %v2395, %v2393
        %v2418 = vpack.c.b16 %v2398, %v2396
        %v2419 = vpack.c.b16 %v2399, %v2397
        %v2420 = vpack.c.b16 %v2402, %v2400
        %v2421 = vpack.c.b16 %v2403, %v2401
        %v2422 = vpack.c.b16 %v2406, %v2404
        %v2423 = vpack.c.b16 %v2407, %v2405
        %2440 = vmatpush.bf16.msra.mxu0 %v2422
        %2441 = vmatpush.bf16.msra.mxu0 %v2420
        %2442 = vmatpush.bf16.msra.mxu0 %v2418
        %2443 = vmatpush.bf16.msra.mxu0 %v2416
        %2444 = vmatpush.bf16.msra.mxu0 %v2414
        %2445 = vmatpush.bf16.msra.mxu0 %v2412
        %2446 = vmatpush.bf16.msra.mxu0 %v2410
        %2447 = vmatpush.bf16.msra.mxu0 %v2408
        %2448 = vmatmul.bf16.gmra.mxu0 %v2337
        %v2449 = vpop.f32.mrf.mxu0
        %v2450 = vadd.f32 %v2356, %v2449
        %v2451 = vpop.f32.mrf.mxu0
        %2452 = vdwg.mxu0
        %2453 = vmatpush.bf16.msra.mxu0 %v2423
        %2454 = vmatpush.bf16.msra.mxu0 %v2421
        %2455 = vmatpush.bf16.msra.mxu0 %v2419
        %2456 = vmatpush.bf16.msra.mxu0 %v2417
        %2457 = vmatpush.bf16.msra.mxu0 %v2415
        %2458 = vmatpush.bf16.msra.mxu0 %v2413
        %2459 = vmatpush.bf16.msra.mxu0 %v2411
        %2460 = vmatpush.bf16.msra.mxu0 %v2409
        %2461 = vmatmul.bf16.gmra.mxu0 %v2337
        %v2462 = vpop.f32.mrf.mxu0
        %v2463 = vadd.f32 %v2357, %v2462
        %v2464 = vpop.f32.mrf.mxu0
        %2465 = vdwg.mxu0
        %v2466 = vmul.f32 %v2450, 0.5
        %v2467 = vmul.f32 %v2463, 0.5
        %v2468 = vmul.f32 %v2450, 0.70710677
        %v2469 = vmul.f32 %v2463, 0.70710677
        %v2470 = vmul.f32 %v2468, %v2468
        %v2471 = vmin.f32 16.0, %v2470
        %v2472 = vmul.f32 %v2471, 2.1237322e-06
        %v2473 = vadd.f32 %v2472, 0.00028619796
        %v2474 = vmul.f32 %v2471, %v2473
        %v2475 = vadd.f32 %v2474, 0.0036580483
        %v2476 = vmul.f32 %v2471, %v2475
        %v2477 = vadd.f32 %v2476, 0.05243302
        %v2478 = vmul.f32 %v2471, %v2477
        %v2479 = vadd.f32 %v2478, 0.18741608
        %v2480 = vmul.f32 %v2471, %v2479
        %v2481 = vadd.f32 %v2480, 1.1283791
        %v2482 = vmul.f32 %v2468, %v2481
        %v2483 = vmul.f32 %v2471, 3.8918573e-05
        %v2484 = vadd.f32 %v2483, 0.001143296
        %v2485 = vmul.f32 %v2471, %v2484
        %v2486 = vadd.f32 %v2485, 0.014752088
        %v2487 = vmul.f32 %v2471, %v2486
        %v2488 = vadd.f32 %v2487, 0.112945676
        %v2489 = vmul.f32 %v2471, %v2488
        %v2490 = vadd.f32 %v2489, 0.4994258
        %v2491 = vmul.f32 %v2471, %v2490
        %v2492 = vadd.f32 %v2491, 1.0
        %v2493 = vrcp.pop %v2492
        %v2494 = vmul.f32 %v2492, %v2493
        %v2495 = vsub.f32 1.0, %v2494
        %v2496 = vmul.f32 %v2493, %v2495
        %v2497 = vadd.f32 %v2493, %v2496
        %vm2498 = vweird.f32 %v2492
        %vm2499 = vweird.f32 %v2493
        %vm2500 = vmor %vm2498, %vm2499
        %v2501 = vsel %vm2500, %v2493, %v2497
        %v2502 = vand.u32 2147483647, %v2492
        %vm2503 = vcmp.eq.f32.partialorder %v2502, 8.507059e+37
        %v2504 = vand.u32 %v2492, 2147483648
        %v2505 = vor.u32 1.1754944e-38, %v2504
        %v2506 = vsel %vm2503, %v2505, %v2501
        %v2507 = vmul.f32 %v2482, %v2506
        %v2508 = vmin.f32 %v2507, 1.0
        %v2509 = vmax.f32 %v2508, -1.0
        %v2510 = vmul.f32 %v2469, %v2469
        %v2511 = vmin.f32 16.0, %v2510
        %v2512 = vmul.f32 %v2511, 2.1237322e-06
        %v2513 = vadd.f32 %v2512, 0.00028619796
        %v2514 = vmul.f32 %v2511, %v2513
        %v2515 = vadd.f32 %v2514, 0.0036580483
        %v2516 = vmul.f32 %v2511, %v2515
        %v2517 = vadd.f32 %v2516, 0.05243302
        %v2518 = vmul.f32 %v2511, %v2517
        %v2519 = vadd.f32 %v2518, 0.18741608
        %v2520 = vmul.f32 %v2511, %v2519
        %v2521 = vadd.f32 %v2520, 1.1283791
        %v2522 = vmul.f32 %v2469, %v2521
        %v2523 = vmul.f32 %v2511, 3.8918573e-05
        %v2524 = vadd.f32 %v2523, 0.001143296
        %v2525 = vmul.f32 %v2511, %v2524
        %v2526 = vadd.f32 %v2525, 0.014752088
        %v2527 = vmul.f32 %v2511, %v2526
        %v2528 = vadd.f32 %v2527, 0.112945676
        %v2529 = vmul.f32 %v2511, %v2528
        %v2530 = vadd.f32 %v2529, 0.4994258
        %v2531 = vmul.f32 %v2511, %v2530
        %v2532 = vadd.f32 %v2531, 1.0
        %v2533 = vrcp.pop %v2532
        %v2534 = vmul.f32 %v2532, %v2533
        %v2535 = vsub.f32 1.0, %v2534
        %v2536 = vmul.f32 %v2533, %v2535
        %v2537 = vadd.f32 %v2533, %v2536
        %vm2538 = vweird.f32 %v2532
        %vm2539 = vweird.f32 %v2533
        %vm2540 = vmor %vm2538, %vm2539
        %v2541 = vsel %vm2540, %v2533, %v2537
        %v2542 = vand.u32 2147483647, %v2532
        %vm2543 = vcmp.eq.f32.partialorder %v2542, 8.507059e+37
        %v2544 = vand.u32 %v2532, 2147483648
        %v2545 = vor.u32 1.1754944e-38, %v2544
        %v2546 = vsel %vm2543, %v2545, %v2541
        %v2547 = vmul.f32 %v2522, %v2546
        %v2548 = vmin.f32 %v2547, 1.0
        %v2549 = vmax.f32 %v2548, -1.0
        %v2550 = vadd.f32 %v2509, 1.0
        %v2551 = vadd.f32 %v2549, 1.0
        %v2552 = vmul.f32 %v2466, %v2550
        %v2553 = vmul.f32 %v2467, %v2551
        %v2554 = vpack.c.bf16 %v2552, %v2552
        %v2555 = vpack.c.bf16 %v2553, %v2553
        %v2556 = vld [vmem:[%s912] sm:$0xf]
        %v2557 = vld [vmem:[%s912 + $0x4] sm:$0xf]
        %v2558 = vld [vmem:[%s912 + $0x8] sm:$0xf]
        %v2559 = vld [vmem:[%s912 + $0xc] sm:$0xf]
        %v2560 = vld [vmem:[%s912 + $0x10] sm:$0xf]
        %v2561 = vld [vmem:[%s912 + $0x14] sm:$0xf]
        %v2562 = vld [vmem:[%s912 + $0x18] sm:$0xf]
        %v2563 = vld [vmem:[%s912 + $0x1c] sm:$0xf]
        %v2564 = vld [vmem:[%s912 + $0x20] sm:$0xf]
        %v2565 = vld [vmem:[%s912 + $0x24] sm:$0xf]
        %v2566 = vld [vmem:[%s912 + $0x28] sm:$0xf]
        %v2567 = vld [vmem:[%s912 + $0x2c] sm:$0xf]
        %v2568 = vld [vmem:[%s912 + $0x30] sm:$0xf]
        %v2569 = vld [vmem:[%s912 + $0x34] sm:$0xf]
        %v2570 = vld [vmem:[%s912 + $0x38] sm:$0xf]
        %v2571 = vld [vmem:[%s912 + $0x3c] sm:$0xf]
        %v2572 = vld [vmem:[%s912 + $0x40] sm:$0xf]
        %v2573 = vld [vmem:[%s912 + $0x44] sm:$0xf]
        %v2574 = vld [vmem:[%s912 + $0x48] sm:$0xf]
        %v2575 = vld [vmem:[%s912 + $0x4c] sm:$0xf]
        %v2576 = vld [vmem:[%s912 + $0x50] sm:$0xf]
        %v2577 = vld [vmem:[%s912 + $0x54] sm:$0xf]
        %v2578 = vld [vmem:[%s912 + $0x58] sm:$0xf]
        %v2579 = vld [vmem:[%s912 + $0x5c] sm:$0xf]
        %v2580 = vld [vmem:[%s912 + $0x60] sm:$0xf]
        %v2581 = vld [vmem:[%s912 + $0x64] sm:$0xf]
        %v2582 = vld [vmem:[%s912 + $0x68] sm:$0xf]
        %v2583 = vld [vmem:[%s912 + $0x6c] sm:$0xf]
        %v2584 = vld [vmem:[%s912 + $0x70] sm:$0xf]
        %v2585 = vld [vmem:[%s912 + $0x74] sm:$0xf]
        %v2586 = vld [vmem:[%s912 + $0x78] sm:$0xf]
        %v2587 = vld [vmem:[%s912 + $0x7c] sm:$0xf]
        %v2588 = vld [vmem:[%s915] sm:$0x1]
        %v2590 = vperm.slane %v2588, 0
        %v2624 = vunpack.c.l.b16 %v2556
        %v2625 = vunpack.c.l.b16 %v2557
        %v2626 = vunpack.c.l.b16 %v2558
        %v2627 = vunpack.c.l.b16 %v2559
        %v2628 = vunpack.c.l.b16 %v2560
        %v2629 = vunpack.c.l.b16 %v2561
        %v2630 = vunpack.c.l.b16 %v2562
        %v2631 = vunpack.c.l.b16 %v2563
        %v2632 = vunpack.c.l.b16 %v2564
        %v2633 = vunpack.c.l.b16 %v2565
        %v2634 = vunpack.c.l.b16 %v2566
        %v2635 = vunpack.c.l.b16 %v2567
        %v2636 = vunpack.c.l.b16 %v2568
        %v2637 = vunpack.c.l.b16 %v2569
        %v2638 = vunpack.c.l.b16 %v2570
        %v2639 = vunpack.c.l.b16 %v2571
        %v2640 = vunpack.c.l.b16 %v2572
        %v2641 = vunpack.c.l.b16 %v2573
        %v2642 = vunpack.c.l.b16 %v2574
        %v2643 = vunpack.c.l.b16 %v2575
        %v2644 = vunpack.c.l.b16 %v2576
        %v2645 = vunpack.c.l.b16 %v2577
        %v2646 = vunpack.c.l.b16 %v2578
        %v2647 = vunpack.c.l.b16 %v2579
        %v2648 = vunpack.c.l.b16 %v2580
        %v2649 = vunpack.c.l.b16 %v2581
        %v2650 = vunpack.c.l.b16 %v2582
        %v2651 = vunpack.c.l.b16 %v2583
        %v2652 = vunpack.c.l.b16 %v2584
        %v2653 = vunpack.c.l.b16 %v2585
        %v2654 = vunpack.c.l.b16 %v2586
        %v2655 = vunpack.c.l.b16 %v2587
        %v2656 = vpack.c.b16 %v2625, %v2624
        %v2657 = vpack.c.b16 %v2627, %v2626
        %v2658 = vpack.c.b16 %v2629, %v2628
        %v2659 = vpack.c.b16 %v2631, %v2630
        %v2660 = vpack.c.b16 %v2633, %v2632
        %v2661 = vpack.c.b16 %v2635, %v2634
        %v2662 = vpack.c.b16 %v2637, %v2636
        %v2663 = vpack.c.b16 %v2639, %v2638
        %v2664 = vpack.c.b16 %v2641, %v2640
        %v2665 = vpack.c.b16 %v2643, %v2642
        %v2666 = vpack.c.b16 %v2645, %v2644
        %v2667 = vpack.c.b16 %v2647, %v2646
        %v2668 = vpack.c.b16 %v2649, %v2648
        %v2669 = vpack.c.b16 %v2651, %v2650
        %v2670 = vpack.c.b16 %v2653, %v2652
        %v2671 = vpack.c.b16 %v2655, %v2654
        %2688 = vmatpush.bf16.msra.mxu0 %v2663
        %2689 = vmatpush.bf16.msra.mxu0 %v2662
        %2690 = vmatpush.bf16.msra.mxu0 %v2661
        %2691 = vmatpush.bf16.msra.mxu0 %v2660
        %2692 = vmatpush.bf16.msra.mxu0 %v2659
        %2693 = vmatpush.bf16.msra.mxu0 %v2658
        %2694 = vmatpush.bf16.msra.mxu0 %v2657
        %2695 = vmatpush.bf16.msra.mxu0 %v2656
        %2696 = vmatmul.bf16.gmra.mxu0 %v2554
        %v2697 = vpop.f32.mrf.mxu0
        %v2698 = vadd.f32 %v2590, %v2697
        %v2699 = vpop.f32.mrf.mxu0
        %2700 = vdwg.mxu0
        %2701 = vmatpush.bf16.msra.mxu0 %v2671
        %2702 = vmatpush.bf16.msra.mxu0 %v2670
        %2703 = vmatpush.bf16.msra.mxu0 %v2669
        %2704 = vmatpush.bf16.msra.mxu0 %v2668
        %2705 = vmatpush.bf16.msra.mxu0 %v2667
        %2706 = vmatpush.bf16.msra.mxu0 %v2666
        %2707 = vmatpush.bf16.msra.mxu0 %v2665
        %2708 = vmatpush.bf16.msra.mxu0 %v2664
        %2709 = vmatmul.bf16.gmra.mxu0 %v2555
        %v2710 = vpop.f32.mrf.mxu0
        %v2711 = vadd.f32 %v2698, %v2710
        %v2712 = vpop.f32.mrf.mxu0
        %2713 = vdwg.mxu0
        %v2714 = vadd.f32 %v2711, %v2336
        %v2715 = vld [vmem:[%s918] sm:$0x1]
        %v2716 = vld [vmem:[%s921] sm:$0x1]
        %2717 = vadd.xlane.f32.xlu0 %v2714
        %v2718 = vpop.xlane.xlu0 %2717
        %v2719 = vmul.f32 %v2718, %v2310
        %v2720 = vsub.f32 %v2714, %v2719
        %v2721 = vmul.f32 %v2720, %v2720
        %2722 = vadd.xlane.f32.xlu0 %v2721
        %v2723 = vpop.xlane.xlu0 %2722
        %v2724 = vmul.f32 %v2723, %v2310
        %v2725 = vadd.f32 %v2724, 1e-12
        %v2726 = vrsqrt.pop %v2725
        %v2727 = vmul.f32 %v2726, %v2725
        %v2728 = vmul.f32 %v2727, %v2726
        %v2729 = vmul.f32 0.5, %v2728
        %v2730 = vsub.f32 1.5, %v2729
        %v2731 = vmul.f32 %v2726, %v2730
        %vm2732 = vweird.f32 %v2725
        %vm2733 = vweird.f32 %v2726
        %vm2734 = vmor %vm2732, %vm2733
        %v2735 = vsel %vm2734, %v2726, %v2731
        %v2736 = vmul.f32 %v2720, %v2735
        %v2738 = vperm.slane %v2715, 0
        %v2740 = vmul.f32 %v2736, %v2738
        %v2742 = vperm.slane %v2716, 0
        %v2744 = vadd.f32 %v2740, %v2742
        %2745 = vst [vmem:[#allocation2] sm:$0xff] %v2744
        %p2746 = scmp.eq.s32.totalorder %s39, 1
        // Predicated region
        $region105: #{behrt_nodemo_forward.1} parent=99 // pred_check
          %p2747 = pneg %p2746
        $region106: #{behrt_nodemo_forward.1} parent=99 // pred_check_branch
          %2749 = sbr.rel (%p2747) target = $region108
        $region107: #{behrt_nodemo_forward.1} parent=99 // pred_region
          %2750 = vst [vmem:[%s850] sm:$0x1] %v2744
        $region108: #{behrt_nodemo_forward.1} parent=99 // pred_fallthru
          _
        %s2751 = sand.u32 %s564, 1
        %s2752 = scalar_lea.sflag [#allocation4], %s2751
        %s2753 = sand.u32 %s564, 1
        %s2754 = scalar_lea.vmem [#allocation3], %s2753
        // Predicated region
        $region109: #{behrt_nodemo_forward.1} parent=99 // pred_check
          %p2755 = pneg %p574
        $region110: #{behrt_nodemo_forward.1} parent=99 // pred_check_branch
          %2757 = sbr.rel (%p2755) target = $region112
        $region111: #{behrt_nodemo_forward.1} parent=99 // pred_region
          %2759 = vsyncadd %s2752, 0
          %s2760 = scalar_lea.hbm %s20, %s38
          %s2762 = sshll.u32 %s2754, 4
          %s2763 = int_to_ptr.vmem [resolvable:$true] %s2762
          %s2764 = sshll.u32 %s2760, 4
          %s2765 = int_to_ptr.hbm [resolvable:$true] %s2764
          %2767 = dma.vmem_to_hbm [thread:$0]  %s2763, 16, %s2765, %s2752
        $region112: #{behrt_nodemo_forward.1} parent=99 // pred_fallthru
          _
      $region100: #{behrt_nodemo_forward.1} parent=5 // pred_fallthru
        _
      %p2768 = scmp.le.s32.totalorder 2, %s29
      // Predicated region
      $region113: #{behrt_nodemo_forward.1} parent=5 // pred_check
        %p2769 = pneg %p2768
      $region114: #{behrt_nodemo_forward.1} parent=5 // pred_check_branch
        %2771 = sbr.rel (%p2769) target = $region116
      $region115: #{behrt_nodemo_forward.1} parent=5 // pred_region
        %s2772 = ssub.s32 %s29, 2
        // Predicated region
        $region117: #{behrt_nodemo_forward.1} parent=115 // pred_check
          %p2773 = pneg %p580
        $region118: #{behrt_nodemo_forward.1} parent=115 // pred_check_branch
          %2775 = sbr.rel (%p2773) target = $region120
        $region119: #{behrt_nodemo_forward.1} parent=115 // pred_region
          %s2776 = sand.u32 %s565, 1
          %s2777 = scalar_lea.sflag [#allocation4], %s2776
          %s2778 = sand.u32 %s565, 1
          %s2779 = scalar_lea.vmem [#allocation3], %s2778
          %2781 = dma.done %s2777, 16
        $region120: #{behrt_nodemo_forward.1} parent=115 // pred_fallthru
          _
      $region116: #{behrt_nodemo_forward.1} parent=5 // pred_fallthru
        _
    $region6: #{behrt_nodemo_forward.1} parent=1 // loop_footer
      %s33 = sadd.s32 1, %s29
    $region7: #{behrt_nodemo_forward.1} parent=1 // loop_footer_branch
      %28 = sbr.rel target = $region3
    $region8: #{behrt_nodemo_forward.1} parent=1 // loop_exit
      _
    %2782 = vsyncpa [#allocation4], 1
    %s2783 = scalar_lea.sflag [#allocation4], 1
    %2784 = vsyncpa %s2783, 1

</llo_original>
